<compile_context>
chip_gen: v5e
topology: v5e:2x2
jax: 0.10.0
libtpu: 0.0.40
codegen_flags: <defaults>
</compile_context>

<pallas_src>
import jax
import jax.numpy as jnp
from jax.experimental import pallas as pl
from jax.experimental.pallas import tpu as pltpu

BN_EPS = 1e-5
H1 = 512   # hidden dim of first Linear (hd == 1)
H2 = 128   # feature dim fed to the classifier (hd == 1)


def domain_agg_kernel(
    x_ref,    # [TB, X]   f32  (cast to bf16 in-kernel)
    w1_ref,   # [X, 512]  bf16 (BN pre-folded)
    b1_ref,   # [1, 512]  bf16 (BN pre-folded)
    w2_ref,   # [512,128] bf16
    b2_ref,   # [1, 128]  f32
    wc_ref,   # [1, 128]  f32  (classifier weight row)
    bc_ref,   # [1, 1]    f32
    out_ref,  # [1, TB]   f32  (lane-dense net_agg row for this tile)
):
    # Cast the x tile on the (idle) VPU instead of a separate wrapper-side XLA op.
    x = x_ref[...].astype(jnp.bfloat16)
    # Linear(X,512) with eval-mode BatchNorm folded into W1/b1; f32 MXU accumulation.
    h = jnp.dot(x, w1_ref[...], preferred_element_type=jnp.float32)
    # bf16 elementwise chain (native on v6e/v7x) halves vreg/spill traffic for the
    # [TB,512] intermediate.  Dropout is identity in eval mode.
    h = h.astype(jnp.bfloat16) + b1_ref[...]
    h = jnp.maximum(h, 0)                                     # ReLU, bf16
    # Linear(512,128); sigmoid via tanh -> one EUP push per element instead of two.
    z = jnp.dot(h, w2_ref[...], preferred_element_type=jnp.float32) + b2_ref[...]
    net = 0.5 * (jnp.tanh(0.5 * z) + 1.0)                     # [TB, 128] f32
    # Classifier Linear(128,1) as an M=1 matmul (contract on dim 1 of both operands)
    # so the per-row scalar lands lane-major -> lane-dense [1, TB] store.
    row = jax.lax.dot_general(
        wc_ref[...], net,
        dimension_numbers=(((1,), (1,)), ((), ())),
        preferred_element_type=jnp.float32)                   # [1, TB]
    out_ref[...] = row + bc_ref[...]


def prepare_params(params):
    """One-time parameter prep (hoisted out of the per-call path):
    fold eval-mode BatchNorm into the first Linear and cast to kernel dtypes."""
    scale = params["gamma"] * jax.lax.rsqrt(params["var"] + BN_EPS)        # [1,512]
    return dict(
        w1=(params["w1"] * scale).astype(jnp.bfloat16),                    # [X,512]
        b1=((params["b1"] - params["mean"]) * scale
            + params["beta"]).astype(jnp.bfloat16),                        # [1,512]
        w2=params["w2"].astype(jnp.bfloat16),                              # [512,128]
        b2=params["b2"].astype(jnp.float32),                               # [1,128]
        wc=params["wc"].reshape(1, H2).astype(jnp.float32),                # [1,128]
        bc=params["bc"].reshape(1, 1).astype(jnp.float32),                 # [1,1]
    )


def _pick_tile(B, tb):
    """Multiple of 128 (lane-dense output rows, sublane-aligned x tiles), never
    larger than needed to cover B in a single tile."""
    tb = max(128, (tb // 128) * 128)
    cover = pl.cdiv(B, 128) * 128
    return min(tb, cover)


def domain_agg_forward(x, prepared, *, tb=512):
    """DomainAGG.forward(x, agg_only=True) -> (net_agg, None, {'Predictions': ...}).

    `prepared` comes from prepare_params() (call it once, not per forward)."""
    B, X = x.shape
    tb = _pick_tile(B, tb)
    # Ragged B handled via a partial trailing block (no jnp.pad HBM copy): rows are
    # independent, so garbage tail rows never contaminate kept rows and are sliced away.
    n_tiles = pl.cdiv(B, tb)
    b_work = n_tiles * tb

    cost = pl.CostEstimate(
        flops=2 * b_work * (X * H1 + H1 * H2 + H2),
        transcendentals=b_work * H2,
        bytes_accessed=(4 * b_work * X            # x (f32, cast in-kernel)
                        + 2 * X * H1 + 2 * H1     # W1/b1 bf16
                        + 2 * H1 * H2 + 4 * H2    # W2 bf16 / b2 f32
                        + 4 * H2 + 4              # wc / bc
                        + 4 * b_work),            # lane-dense f32 output
    )

    const = lambda i: (0, 0)  # weights/biases: same block every step -> VMEM-resident

    out2d = pl.pallas_call(
        domain_agg_kernel,
        out_shape=jax.ShapeDtypeStruct((n_tiles, tb), jnp.float32),
        grid=(n_tiles,),
        in_specs=[
            pl.BlockSpec((tb, X), lambda i: (i, 0)),   # x tile (pipelined)
            pl.BlockSpec((X, H1), const),              # W1 (BN folded)
            pl.BlockSpec((1, H1), const),              # b1 (BN folded)
            pl.BlockSpec((H1, H2), const),             # W2
            pl.BlockSpec((1, H2), const),              # b2
            pl.BlockSpec((1, H2), const),              # wc row
            pl.BlockSpec((1, 1), const),               # bc
        ],
        out_specs=pl.BlockSpec((1, tb), lambda i: (i, 0)),     # lane-dense rows
        compiler_params=pltpu.CompilerParams(
            dimension_semantics=("parallel",),
            vmem_limit_bytes=(32 << 20) if tb >= 1024 else None,
        ),
        cost_estimate=cost,
    )(x.astype(jnp.float32), prepared["w1"], prepared["b1"], prepared["w2"],
      prepared["b2"], prepared["wc"], prepared["bc"])

    net_agg = out2d.reshape(-1)[:B].reshape(B, 1)
    end_points = {"Predictions": jax.nn.sigmoid(net_agg)}
    return net_agg, None, end_points


def init_params(key, in_dim):
    """Deterministic synthetic parameters matching hd==1 shapes (f32 master copies)."""
    keys = jax.random.split(key, 10)
    s = 0.05
    return dict(
        w1=s * jax.random.normal(keys[0], (in_dim, H1), jnp.float32),
        b1=s * jax.random.normal(keys[1], (1, H1), jnp.float32),
        gamma=1.0 + s * jax.random.normal(keys[2], (1, H1), jnp.float32),
        beta=s * jax.random.normal(keys[3], (1, H1), jnp.float32),
        mean=s * jax.random.normal(keys[4], (1, H1), jnp.float32),
        var=1.0 + jnp.abs(s * jax.random.normal(keys[5], (1, H1), jnp.float32)),
        w2=s * jax.random.normal(keys[6], (H1, H2), jnp.float32),
        b2=s * jax.random.normal(keys[7], (1, H2), jnp.float32),
        wc=s * jax.random.normal(keys[8], (H2, 1), jnp.float32),
        bc=s * jax.random.normal(keys[9], (1, 1), jnp.float32),
    )


def reference_forward(x, p):
    """Plain-JAX f32 reference of the original (unfolded) eval-mode forward."""
    h = x @ p["w1"] + p["b1"]
    h = (h - p["mean"]) * jax.lax.rsqrt(p["var"] + BN_EPS) * p["gamma"] + p["beta"]
    h = jnp.maximum(h, 0.0)
    net = jax.nn.sigmoid(h @ p["w2"] + p["b2"])
    out = net @ p["wc"] + p["bc"]
    return out, jax.nn.sigmoid(out)


if __name__ == "__main__":
    key = jax.random.PRNGKey(0)
    k_x1, k_x2, k_p = jax.random.split(key, 3)

    X = 64
    params = init_params(k_p, X)
    prepared = prepare_params(params)   # hoisted one-time param prep

    # Case 1: B=200  -> tb clamps to 256, single partial tile (ragged, no pad).
    # Case 2: B=1000 -> tb=512, two tiles (second partial) -> exercises the
    #         multi-tile "parallel" batch axis and lane-dense (1, tb) output blocks.
    for B, kx in ((200, k_x1), (1000, k_x2)):
        x = jax.random.normal(kx, (B, X), jnp.float32)

        net_agg, net_rand, end_points = domain_agg_forward(x, prepared, tb=512)
        net_agg = jax.block_until_ready(net_agg)
        preds = jax.block_until_ready(end_points["Predictions"])

        ref_out, ref_pred = reference_forward(x, params)

        assert net_rand is None
        assert net_agg.shape == (B, 1) and preds.shape == (B, 1)
        # bf16 matmuls / bf16 elementwise chain with f32 accumulation -> loosened tol.
        assert jnp.allclose(net_agg, ref_out, atol=2e-2, rtol=2e-2)
        assert jnp.allclose(preds, ref_pred, atol=2e-2, rtol=2e-2)

    print("KERNEL_OK")
</pallas_src>

<mosaic_0001>
module attributes {stable_mosaic.version = 11 : i64} {
  func.func @domain_agg_kernel(%arg0: i32, %arg1: memref<256x64xf32, #tpu.memory_space<vmem>>, %arg2: memref<64x512xbf16, #tpu.memory_space<vmem>>, %arg3: memref<1x512xbf16, #tpu.memory_space<vmem>>, %arg4: memref<512x128xbf16, #tpu.memory_space<vmem>>, %arg5: memref<1x128xf32, #tpu.memory_space<vmem>>, %arg6: memref<1x128xf32, #tpu.memory_space<vmem>>, %arg7: memref<1x1xf32, #tpu.memory_space<vmem>>, %arg8: memref<1x256xf32, #tpu.memory_space<vmem>>) attributes {dimension_semantics = [#tpu.dimension_semantics<parallel>], iteration_bounds = array<i64: 1>, scalar_prefetch = 0 : i64, scratch_operands = 0 : i64, tpu.core_type = #tpu.core_type<tc>, window_params = [{transform_indices = @transform_0, window_bounds = array<i64: 256, 64>}, {pipeline_mode = #tpu.pipeline_mode<synchronous>, transform_indices = @transform_1, window_bounds = array<i64: 64, 512>}, {pipeline_mode = #tpu.pipeline_mode<synchronous>, transform_indices = @transform_2, window_bounds = array<i64: 1, 512>}, {pipeline_mode = #tpu.pipeline_mode<synchronous>, transform_indices = @transform_3, window_bounds = array<i64: 512, 128>}, {pipeline_mode = #tpu.pipeline_mode<synchronous>, transform_indices = @transform_4, window_bounds = array<i64: 1, 128>}, {pipeline_mode = #tpu.pipeline_mode<synchronous>, transform_indices = @transform_5, window_bounds = array<i64: 1, 128>}, {pipeline_mode = #tpu.pipeline_mode<synchronous>, transform_indices = @transform_6, window_bounds = array<i64: 1, 1>}, {transform_indices = @transform_7, window_bounds = array<i64: 1, 256>}]} {
    %c0 = arith.constant 0 : index
    %c0_0 = arith.constant 0 : index
    %0 = vector.load %arg1[%c0, %c0_0] : memref<256x64xf32, #tpu.memory_space<vmem>>, vector<256x64xf32>
    %1 = arith.truncf %0 : vector<256x64xf32> to vector<256x64xbf16>
    %c0_1 = arith.constant 0 : index
    %c0_2 = arith.constant 0 : index
    %2 = vector.load %arg2[%c0_1, %c0_2] : memref<64x512xbf16, #tpu.memory_space<vmem>>, vector<64x512xbf16>
    %cst = arith.constant dense<0.000000e+00> : vector<256x512xf32>
    %3 = tpu.matmul %1, %2, %cst {dimension_numbers = #tpu.dot_dimension_numbers<[1], [0], [0], [1], [0, 0, 1, 1], [], []>} : vector<256x64xbf16>, vector<64x512xbf16>, vector<256x512xf32> -> vector<256x512xf32>
    %4 = arith.truncf %3 : vector<256x512xf32> to vector<256x512xbf16>
    %c0_3 = arith.constant 0 : index
    %c0_4 = arith.constant 0 : index
    %5 = vector.load %arg3[%c0_3, %c0_4] : memref<1x512xbf16, #tpu.memory_space<vmem>>, vector<1x512xbf16>
    %6 = vector.broadcast %5 : vector<1x512xbf16> to vector<256x512xbf16>
    %7 = arith.addf %4, %6 : vector<256x512xbf16>
    %cst_5 = arith.constant 0.000000e+00 : bf16
    %8 = vector.broadcast %cst_5 : bf16 to vector<256x512xbf16>
    %9 = arith.maximumf %7, %8 : vector<256x512xbf16>
    %c0_6 = arith.constant 0 : index
    %c0_7 = arith.constant 0 : index
    %10 = vector.load %arg4[%c0_6, %c0_7] : memref<512x128xbf16, #tpu.memory_space<vmem>>, vector<512x128xbf16>
    %cst_8 = arith.constant dense<0.000000e+00> : vector<256x128xf32>
    %11 = tpu.matmul %9, %10, %cst_8 {dimension_numbers = #tpu.dot_dimension_numbers<[1], [0], [0], [1], [0, 0, 1, 1], [], []>} : vector<256x512xbf16>, vector<512x128xbf16>, vector<256x128xf32> -> vector<256x128xf32>
    %c0_9 = arith.constant 0 : index
    %c0_10 = arith.constant 0 : index
    %12 = vector.load %arg5[%c0_9, %c0_10] : memref<1x128xf32, #tpu.memory_space<vmem>>, vector<1x128xf32>
    %13 = vector.broadcast %12 : vector<1x128xf32> to vector<256x128xf32>
    %14 = arith.addf %11, %13 : vector<256x128xf32>
    %cst_11 = arith.constant 5.000000e-01 : f32
    %15 = vector.broadcast %cst_11 : f32 to vector<256x128xf32>
    %16 = arith.mulf %15, %14 : vector<256x128xf32>
    %17 = math.tanh %16 : vector<256x128xf32>
    %cst_12 = arith.constant 1.000000e+00 : f32
    %18 = vector.broadcast %cst_12 : f32 to vector<256x128xf32>
    %19 = arith.addf %17, %18 : vector<256x128xf32>
    %cst_13 = arith.constant 5.000000e-01 : f32
    %20 = vector.broadcast %cst_13 : f32 to vector<256x128xf32>
    %21 = arith.mulf %20, %19 : vector<256x128xf32>
    %c0_14 = arith.constant 0 : index
    %c0_15 = arith.constant 0 : index
    %22 = vector.load %arg6[%c0_14, %c0_15] : memref<1x128xf32, #tpu.memory_space<vmem>>, vector<1x128xf32>
    %cst_16 = arith.constant dense<0.000000e+00> : vector<1x256xf32>
    %23 = tpu.matmul %22, %21, %cst_16 {dimension_numbers = #tpu.dot_dimension_numbers<[1], [1], [0], [0], [0, 0, 1, 0], [], []>} : vector<1x128xf32>, vector<256x128xf32>, vector<1x256xf32> -> vector<1x256xf32>
    %c0_17 = arith.constant 0 : index
    %c0_18 = arith.constant 0 : index
    %24 = vector.load %arg7[%c0_17, %c0_18] : memref<1x1xf32, #tpu.memory_space<vmem>>, vector<1x1xf32>
    %25 = vector.broadcast %24 : vector<1x1xf32> to vector<1x256xf32>
    %26 = arith.addf %23, %25 : vector<1x256xf32>
    %c0_19 = arith.constant 0 : index
    %c0_20 = arith.constant 0 : index
    %27 = vector.load %arg8[%c0_19, %c0_20] : memref<1x256xf32, #tpu.memory_space<vmem>>, vector<1x256xf32>
    tpu.vector_store %arg8[%c0_19, %c0_20], %26 {strides = array<i32>} : memref<1x256xf32, #tpu.memory_space<vmem>>, vector<1x256xf32>,
    return
  }
  func.func @transform_0(%arg0: i32) -> (i32, i32) {
    %c0_i32 = arith.constant 0 : i32
    %c0_i32_0 = arith.constant 0 : i32
    return %arg0, %c0_i32 : i32, i32
  }
  func.func @transform_1(%arg0: i32) -> (i32, i32) {
    %c0_i32 = arith.constant 0 : i32
    %c0_i32_0 = arith.constant 0 : i32
    %c0_i32_1 = arith.constant 0 : i32
    return %c0_i32, %c0_i32_0 : i32, i32
  }
  func.func @transform_2(%arg0: i32) -> (i32, i32) {
    %c0_i32 = arith.constant 0 : i32
    %c0_i32_0 = arith.constant 0 : i32
    %c0_i32_1 = arith.constant 0 : i32
    return %c0_i32, %c0_i32_0 : i32, i32
  }
  func.func @transform_3(%arg0: i32) -> (i32, i32) {
    %c0_i32 = arith.constant 0 : i32
    %c0_i32_0 = arith.constant 0 : i32
    %c0_i32_1 = arith.constant 0 : i32
    return %c0_i32, %c0_i32_0 : i32, i32
  }
  func.func @transform_4(%arg0: i32) -> (i32, i32) {
    %c0_i32 = arith.constant 0 : i32
    %c0_i32_0 = arith.constant 0 : i32
    %c0_i32_1 = arith.constant 0 : i32
    return %c0_i32, %c0_i32_0 : i32, i32
  }
  func.func @transform_5(%arg0: i32) -> (i32, i32) {
    %c0_i32 = arith.constant 0 : i32
    %c0_i32_0 = arith.constant 0 : i32
    %c0_i32_1 = arith.constant 0 : i32
    return %c0_i32, %c0_i32_0 : i32, i32
  }
  func.func @transform_6(%arg0: i32) -> (i32, i32) {
    %c0_i32 = arith.constant 0 : i32
    %c0_i32_0 = arith.constant 0 : i32
    %c0_i32_1 = arith.constant 0 : i32
    return %c0_i32, %c0_i32_0 : i32, i32
  }
  func.func @transform_7(%arg0: i32) -> (i32, i32) {
    %c0_i32 = arith.constant 0 : i32
    %c0_i32_0 = arith.constant 0 : i32
    return %arg0, %c0_i32 : i32, i32
  }
}

</mosaic_0001>

<llo_original>
// kernel: tpu_custom_call.1
$region0: #{tpu_custom_call.1}
  #allocation0 [shape = 'u32[]', space=smem, size = 0x4, offset = 0x4, fixed_abs, tag = 'smem constant byte address 0x4 - core index']
  #allocation1 [shape = 'u32[72,128]{1,0:T(1,128)}', space=vmem, size = 0x9000, scoped, tag = 'internal scratch']
  #allocation2 [shape = 'f32[1,1]{1,0:T(1,128)S(1)}', space=vmem, size = 0x200, scoped, tag = 'scoped memory for tpu_custom_call.1']
  %s0 = inlined_call_operand.vmem [shape: f32[200,64], index: 0, kind: input, shape index: {}]
  %s1 = inlined_call_operand.hbm [shape: bf16[64,512], index: 1, kind: input, shape index: {}]
  %s2 = inlined_call_operand.vmem [shape: bf16[1,512], index: 2, kind: input, shape index: {}]
  %s3 = inlined_call_operand.vmem [shape: bf16[512,128], index: 3, kind: input, shape index: {}]
  %s4 = inlined_call_operand.vmem [shape: f32[1,128], index: 4, kind: input, shape index: {}]
  %s5 = inlined_call_operand.vmem [shape: f32[1,128], index: 5, kind: input, shape index: {}]
  %s6 = inlined_call_operand.<no memory space> [shape: f32[1,1], index: 6, kind: input, shape index: {}]
  %s7 = inlined_call_operand.hbm [shape: f32[1,256], index: 7, kind: output, shape index: {}]
  %s8 = sld [smem:[#allocation0]]
  $region42: #{tpu_custom_call.1} parent=0
    _
  %s10 = ssub.s32 1, %s8
  %s11 = scalar_select 0, %s10, %s8
  %v12 = vstv %s6
  %13 = vst [vmem:[#allocation2] sm:$0x1] %v12
  $region1: #{tpu_custom_call.1} parent=0
    #allocation3 [shape = 'u8[65536]{0}', space=vmem, size = 0x10000, scoped, tag = 'input window, operand 1, single buffered']
    #allocation4 [shape = 's32[1]{0}', space=sflag, size = 0x4, scoped, tag = 'scoped memory for tpu_custom_call.1']
    #allocation5 [shape = 's32[1]{0}', space=sflag, size = 0x4, scoped, tag = 'scoped memory for tpu_custom_call.1']
    #allocation6 [shape = 'u8[1024]{0}', space=vmem, size = 0x400, scoped, tag = 'output window, operand 0, single buffered']
    %14 = vsyncpa [#allocation4], 0
    %15 = vsyncpa [#allocation5], 0
    // Predicated region
    $region2: #{tpu_custom_call.1} parent=1 // pred_check
      _
    $region3: #{tpu_custom_call.1} parent=1 // pred_check_branch
      %17 = sbr.rel (0) target = $region5
    $region4: #{tpu_custom_call.1} parent=1 // pred_region
      _
    $region5: #{tpu_custom_call.1} parent=1 // pred_fallthru
      _
    // Predicated region
    $region6: #{tpu_custom_call.1} parent=1 // pred_check
      _
    $region7: #{tpu_custom_call.1} parent=1 // pred_check_branch
      %19 = sbr.rel (0) target = $region9
    $region8: #{tpu_custom_call.1} parent=1 // pred_region
      %21 = vsyncadd [#allocation4], 0
      %s22 = sshll.u32 %s1, 4
      %s23 = int_to_ptr.hbm [resolvable:$true] %s22
      %s24 = sshll.u32 [#allocation3], 4
      %s25 = int_to_ptr.vmem [resolvable:$true] %s24
      %30 = dma.hbm_to_vmem [thread:$0]  %s23, 2048, %s25, [#allocation4], 256, 256, 16
    $region9: #{tpu_custom_call.1} parent=1 // pred_fallthru
      _
    // Predicated region
    $region10: #{tpu_custom_call.1} parent=1 // pred_check
      _
    $region11: #{tpu_custom_call.1} parent=1 // pred_check_branch
      %32 = sbr.rel (0) target = $region13
    $region12: #{tpu_custom_call.1} parent=1 // pred_region
      _
    $region13: #{tpu_custom_call.1} parent=1 // pred_fallthru
      _
    // Predicated region
    $region14: #{tpu_custom_call.1} parent=1 // pred_check
      _
    $region15: #{tpu_custom_call.1} parent=1 // pred_check_branch
      %34 = sbr.rel (0) target = $region17
    $region16: #{tpu_custom_call.1} parent=1 // pred_region
      _
    $region17: #{tpu_custom_call.1} parent=1 // pred_fallthru
      _
    // Predicated region
    $region18: #{tpu_custom_call.1} parent=1 // pred_check
      _
    $region19: #{tpu_custom_call.1} parent=1 // pred_check_branch
      %36 = sbr.rel (0) target = $region21
    $region20: #{tpu_custom_call.1} parent=1 // pred_region
      _
    $region21: #{tpu_custom_call.1} parent=1 // pred_fallthru
      _
    // Predicated region
    $region22: #{tpu_custom_call.1} parent=1 // pred_check
      _
    $region23: #{tpu_custom_call.1} parent=1 // pred_check_branch
      %38 = sbr.rel (0) target = $region25
    $region24: #{tpu_custom_call.1} parent=1 // pred_region
      _
    $region25: #{tpu_custom_call.1} parent=1 // pred_fallthru
      _
    // Predicated region
    $region26: #{tpu_custom_call.1} parent=1 // pred_check
      _
    $region27: #{tpu_custom_call.1} parent=1 // pred_check_branch
      %40 = sbr.rel (0) target = $region29
    $region28: #{tpu_custom_call.1} parent=1 // pred_region
      _
    $region29: #{tpu_custom_call.1} parent=1 // pred_fallthru
      _
    // Predicated region
    $region30: #{tpu_custom_call.1} parent=1 // pred_check
      _
    $region31: #{tpu_custom_call.1} parent=1 // pred_check_branch
      %42 = sbr.rel (0) target = $region33
    $region32: #{tpu_custom_call.1} parent=1 // pred_region
      %44 = dma.done [#allocation4], 2048
    $region33: #{tpu_custom_call.1} parent=1 // pred_fallthru
      _
    %v46 = vld [vmem:[%s0] sm:$0xff]
    %v47 = vld [vmem:[%s0 + $0x8] sm:$0xff]
    %v48 = vld [vmem:[%s0 + $0x10] sm:$0xff]
    %v49 = vld [vmem:[%s0 + $0x18] sm:$0xff]
    %v50 = vld [vmem:[%s0 + $0x20] sm:$0xff]
    %v51 = vld [vmem:[%s0 + $0x28] sm:$0xff]
    %v52 = vld [vmem:[%s0 + $0x30] sm:$0xff]
    %v53 = vld [vmem:[%s0 + $0x38] sm:$0xff]
    %v54 = vld [vmem:[%s0 + $0x40] sm:$0xff]
    %v55 = vld [vmem:[%s0 + $0x48] sm:$0xff]
    %v56 = vld [vmem:[%s0 + $0x50] sm:$0xff]
    %v57 = vld [vmem:[%s0 + $0x58] sm:$0xff]
    %v58 = vld [vmem:[%s0 + $0x60] sm:$0xff]
    %v59 = vld [vmem:[%s0 + $0x68] sm:$0xff]
    %v60 = vld [vmem:[%s0 + $0x70] sm:$0xff]
    %v61 = vld [vmem:[%s0 + $0x78] sm:$0xff]
    %v62 = vld [vmem:[%s0 + $0x80] sm:$0xff]
    %v63 = vld [vmem:[%s0 + $0x88] sm:$0xff]
    %v64 = vld [vmem:[%s0 + $0x90] sm:$0xff]
    %v65 = vld [vmem:[%s0 + $0x98] sm:$0xff]
    %v66 = vld [vmem:[%s0 + $0xa0] sm:$0xff]
    %v67 = vld [vmem:[%s0 + $0xa8] sm:$0xff]
    %v68 = vld [vmem:[%s0 + $0xb0] sm:$0xff]
    %v69 = vld [vmem:[%s0 + $0xb8] sm:$0xff]
    %v70 = vld [vmem:[%s0 + $0xc0] sm:$0xff]
    %v71 = vld [vmem:[%s0 + $0xc8] sm:$0xff]
    %v72 = vld [vmem:[%s0 + $0xd0] sm:$0xff]
    %v73 = vld [vmem:[%s0 + $0xd8] sm:$0xff]
    %v74 = vld [vmem:[%s0 + $0xe0] sm:$0xff]
    %v75 = vld [vmem:[%s0 + $0xe8] sm:$0xff]
    %v76 = vld [vmem:[%s0 + $0xf0] sm:$0xff]
    %v77 = vld [vmem:[%s0 + $0xf8] sm:$0xff]
    %v78 = vpack.c.bf16 %v47, %v46
    %v79 = vpack.c.bf16 %v49, %v48
    %v80 = vpack.c.bf16 %v51, %v50
    %v81 = vpack.c.bf16 %v53, %v52
    %v82 = vpack.c.bf16 %v55, %v54
    %v83 = vpack.c.bf16 %v57, %v56
    %v84 = vpack.c.bf16 %v59, %v58
    %v85 = vpack.c.bf16 %v61, %v60
    %v86 = vpack.c.bf16 %v63, %v62
    %v87 = vpack.c.bf16 %v65, %v64
    %v88 = vpack.c.bf16 %v67, %v66
    %v89 = vpack.c.bf16 %v69, %v68
    %v90 = vpack.c.bf16 %v71, %v70
    %v91 = vpack.c.bf16 %v73, %v72
    %v92 = vpack.c.bf16 %v75, %v74
    %v93 = vpack.c.bf16 %v77, %v76
    %v94 = vld [vmem:[#allocation3] sm:$0xff]
    %v95 = vld [vmem:[#allocation3 + $0x8] sm:$0xff]
    %v96 = vld [vmem:[#allocation3 + $0x10] sm:$0xff]
    %v97 = vld [vmem:[#allocation3 + $0x18] sm:$0xff]
    %v98 = vld [vmem:[#allocation3 + $0x20] sm:$0xff]
    %v99 = vld [vmem:[#allocation3 + $0x28] sm:$0xff]
    %v100 = vld [vmem:[#allocation3 + $0x30] sm:$0xff]
    %v101 = vld [vmem:[#allocation3 + $0x38] sm:$0xff]
    %v102 = vld [vmem:[#allocation3 + $0x40] sm:$0xff]
    %v103 = vld [vmem:[#allocation3 + $0x48] sm:$0xff]
    %v104 = vld [vmem:[#allocation3 + $0x50] sm:$0xff]
    %v105 = vld [vmem:[#allocation3 + $0x58] sm:$0xff]
    %v106 = vld [vmem:[#allocation3 + $0x60] sm:$0xff]
    %v107 = vld [vmem:[#allocation3 + $0x68] sm:$0xff]
    %v108 = vld [vmem:[#allocation3 + $0x70] sm:$0xff]
    %v109 = vld [vmem:[#allocation3 + $0x78] sm:$0xff]
    %v126 = vunpack.c.l.b16 %v94
    %v127 = vunpack.c.h.b16 %v94
    %v128 = vunpack.c.l.b16 %v95
    %v129 = vunpack.c.h.b16 %v95
    %v130 = vunpack.c.l.b16 %v96
    %v131 = vunpack.c.h.b16 %v96
    %v132 = vunpack.c.l.b16 %v97
    %v133 = vunpack.c.h.b16 %v97
    %v134 = vunpack.c.l.b16 %v98
    %v135 = vunpack.c.h.b16 %v98
    %v136 = vunpack.c.l.b16 %v99
    %v137 = vunpack.c.h.b16 %v99
    %v138 = vunpack.c.l.b16 %v100
    %v139 = vunpack.c.h.b16 %v100
    %v140 = vunpack.c.l.b16 %v101
    %v141 = vunpack.c.h.b16 %v101
    %v142 = vunpack.c.l.b16 %v102
    %v143 = vunpack.c.h.b16 %v102
    %v144 = vunpack.c.l.b16 %v103
    %v145 = vunpack.c.h.b16 %v103
    %v146 = vunpack.c.l.b16 %v104
    %v147 = vunpack.c.h.b16 %v104
    %v148 = vunpack.c.l.b16 %v105
    %v149 = vunpack.c.h.b16 %v105
    %v150 = vunpack.c.l.b16 %v106
    %v151 = vunpack.c.h.b16 %v106
    %v152 = vunpack.c.l.b16 %v107
    %v153 = vunpack.c.h.b16 %v107
    %v154 = vunpack.c.l.b16 %v108
    %v155 = vunpack.c.h.b16 %v108
    %v156 = vunpack.c.l.b16 %v109
    %v157 = vunpack.c.h.b16 %v109
    %v158 = vpack.c.b16 %v130, %v126
    %v159 = vpack.c.b16 %v131, %v127
    %v160 = vpack.c.b16 %v132, %v128
    %v161 = vpack.c.b16 %v133, %v129
    %v162 = vpack.c.b16 %v138, %v134
    %v163 = vpack.c.b16 %v139, %v135
    %v164 = vpack.c.b16 %v140, %v136
    %v165 = vpack.c.b16 %v141, %v137
    %v166 = vpack.c.b16 %v146, %v142
    %v167 = vpack.c.b16 %v147, %v143
    %v168 = vpack.c.b16 %v148, %v144
    %v169 = vpack.c.b16 %v149, %v145
    %v170 = vpack.c.b16 %v154, %v150
    %v171 = vpack.c.b16 %v155, %v151
    %v172 = vpack.c.b16 %v156, %v152
    %v173 = vpack.c.b16 %v157, %v153
    %vm190 = vcmask 523264
    %v192 = vsel %vm190, %v78, 0
    %v195 = vsel %vm190, %v79, 0
    %v198 = vsel %vm190, %v80, 0
    %v201 = vsel %vm190, %v81, 0
    %v204 = vsel %vm190, %v82, 0
    %v207 = vsel %vm190, %v83, 0
    %v210 = vsel %vm190, %v84, 0
    %v213 = vsel %vm190, %v85, 0
    %v216 = vsel %vm190, %v86, 0
    %v219 = vsel %vm190, %v87, 0
    %v222 = vsel %vm190, %v88, 0
    %v225 = vsel %vm190, %v89, 0
    %v228 = vsel %vm190, %v90, 0
    %v231 = vsel %vm190, %v91, 0
    %v234 = vsel %vm190, %v92, 0
    %v237 = vsel %vm190, %v93, 0
    %239 = vmatpush.bf16.msra.mxu0 0
    %240 = vmatpush.bf16.msra.mxu0 0
    %241 = vmatpush.bf16.msra.mxu0 0
    %242 = vmatpush.bf16.msra.mxu0 0
    %243 = vmatpush.bf16.msra.mxu0 %v170
    %244 = vmatpush.bf16.msra.mxu0 %v166
    %245 = vmatpush.bf16.msra.mxu0 %v162
    %246 = vmatpush.bf16.msra.mxu0 %v158
    %247 = vmatmul.bf16.gmra.mxu0 %v192
    %v248 = vpop.f32.mrf.mxu0
    %v249 = vadd.f32 0.0, %v248
    %v250 = vpop.f32.mrf.mxu0
    %v251 = vadd.f32 0.0, %v250
    %252 = vmatmul.bf16.gmra.mxu0 %v195
    %v253 = vpop.f32.mrf.mxu0
    %v254 = vadd.f32 0.0, %v253
    %v255 = vpop.f32.mrf.mxu0
    %v256 = vadd.f32 0.0, %v255
    %257 = vmatmul.bf16.gmra.mxu0 %v198
    %v258 = vpop.f32.mrf.mxu0
    %v259 = vadd.f32 0.0, %v258
    %v260 = vpop.f32.mrf.mxu0
    %v261 = vadd.f32 0.0, %v260
    %262 = vmatmul.bf16.gmra.mxu0 %v201
    %v263 = vpop.f32.mrf.mxu0
    %v264 = vadd.f32 0.0, %v263
    %v265 = vpop.f32.mrf.mxu0
    %v266 = vadd.f32 0.0, %v265
    %267 = vmatmul.bf16.gmra.mxu0 %v204
    %v268 = vpop.f32.mrf.mxu0
    %v269 = vadd.f32 0.0, %v268
    %v270 = vpop.f32.mrf.mxu0
    %v271 = vadd.f32 0.0, %v270
    %272 = vmatmul.bf16.gmra.mxu0 %v207
    %v273 = vpop.f32.mrf.mxu0
    %v274 = vadd.f32 0.0, %v273
    %v275 = vpop.f32.mrf.mxu0
    %v276 = vadd.f32 0.0, %v275
    %277 = vmatmul.bf16.gmra.mxu0 %v210
    %v278 = vpop.f32.mrf.mxu0
    %v279 = vadd.f32 0.0, %v278
    %v280 = vpop.f32.mrf.mxu0
    %v281 = vadd.f32 0.0, %v280
    %282 = vmatmul.bf16.gmra.mxu0 %v213
    %v283 = vpop.f32.mrf.mxu0
    %v284 = vadd.f32 0.0, %v283
    %v285 = vpop.f32.mrf.mxu0
    %v286 = vadd.f32 0.0, %v285
    %287 = vmatmul.bf16.gmra.mxu0 %v216
    %v288 = vpop.f32.mrf.mxu0
    %v289 = vadd.f32 0.0, %v288
    %v290 = vpop.f32.mrf.mxu0
    %v291 = vadd.f32 0.0, %v290
    %292 = vmatmul.bf16.gmra.mxu0 %v219
    %v293 = vpop.f32.mrf.mxu0
    %v294 = vadd.f32 0.0, %v293
    %v295 = vpop.f32.mrf.mxu0
    %v296 = vadd.f32 0.0, %v295
    %297 = vmatmul.bf16.gmra.mxu0 %v222
    %v298 = vpop.f32.mrf.mxu0
    %v299 = vadd.f32 0.0, %v298
    %v300 = vpop.f32.mrf.mxu0
    %v301 = vadd.f32 0.0, %v300
    %302 = vmatmul.bf16.gmra.mxu0 %v225
    %v303 = vpop.f32.mrf.mxu0
    %v304 = vadd.f32 0.0, %v303
    %v305 = vpop.f32.mrf.mxu0
    %v306 = vadd.f32 0.0, %v305
    %307 = vmatmul.bf16.gmra.mxu0 %v228
    %v308 = vpop.f32.mrf.mxu0
    %v309 = vadd.f32 0.0, %v308
    %v310 = vpop.f32.mrf.mxu0
    %v311 = vadd.f32 0.0, %v310
    %312 = vmatmul.bf16.gmra.mxu0 %v231
    %v313 = vpop.f32.mrf.mxu0
    %v314 = vadd.f32 0.0, %v313
    %v315 = vpop.f32.mrf.mxu0
    %v316 = vadd.f32 0.0, %v315
    %317 = vmatmul.bf16.gmra.mxu0 %v234
    %v318 = vpop.f32.mrf.mxu0
    %v319 = vadd.f32 0.0, %v318
    %v320 = vpop.f32.mrf.mxu0
    %v321 = vadd.f32 0.0, %v320
    %322 = vmatmul.bf16.gmra.mxu0 %v237
    %v323 = vpop.f32.mrf.mxu0
    %v324 = vadd.f32 0.0, %v323
    %v325 = vpop.f32.mrf.mxu0
    %v326 = vadd.f32 0.0, %v325
    %327 = vdwg.mxu0
    %328 = vmatpush.bf16.msra.mxu0 0
    %329 = vmatpush.bf16.msra.mxu0 0
    %330 = vmatpush.bf16.msra.mxu0 0
    %331 = vmatpush.bf16.msra.mxu0 0
    %332 = vmatpush.bf16.msra.mxu0 %v171
    %333 = vmatpush.bf16.msra.mxu0 %v167
    %334 = vmatpush.bf16.msra.mxu0 %v163
    %335 = vmatpush.bf16.msra.mxu0 %v159
    %336 = vmatmul.bf16.gmra.mxu0 %v192
    %v337 = vpop.f32.mrf.mxu0
    %v338 = vadd.f32 0.0, %v337
    %v339 = vpop.f32.mrf.mxu0
    %v340 = vadd.f32 0.0, %v339
    %341 = vmatmul.bf16.gmra.mxu0 %v195
    %v342 = vpop.f32.mrf.mxu0
    %v343 = vadd.f32 0.0, %v342
    %v344 = vpop.f32.mrf.mxu0
    %v345 = vadd.f32 0.0, %v344
    %346 = vmatmul.bf16.gmra.mxu0 %v198
    %v347 = vpop.f32.mrf.mxu0
    %v348 = vadd.f32 0.0, %v347
    %v349 = vpop.f32.mrf.mxu0
    %v350 = vadd.f32 0.0, %v349
    %351 = vmatmul.bf16.gmra.mxu0 %v201
    %v352 = vpop.f32.mrf.mxu0
    %v353 = vadd.f32 0.0, %v352
    %v354 = vpop.f32.mrf.mxu0
    %v355 = vadd.f32 0.0, %v354
    %356 = vmatmul.bf16.gmra.mxu0 %v204
    %v357 = vpop.f32.mrf.mxu0
    %v358 = vadd.f32 0.0, %v357
    %v359 = vpop.f32.mrf.mxu0
    %v360 = vadd.f32 0.0, %v359
    %361 = vmatmul.bf16.gmra.mxu0 %v207
    %v362 = vpop.f32.mrf.mxu0
    %v363 = vadd.f32 0.0, %v362
    %v364 = vpop.f32.mrf.mxu0
    %v365 = vadd.f32 0.0, %v364
    %366 = vmatmul.bf16.gmra.mxu0 %v210
    %v367 = vpop.f32.mrf.mxu0
    %v368 = vadd.f32 0.0, %v367
    %v369 = vpop.f32.mrf.mxu0
    %v370 = vadd.f32 0.0, %v369
    %371 = vmatmul.bf16.gmra.mxu0 %v213
    %v372 = vpop.f32.mrf.mxu0
    %v373 = vadd.f32 0.0, %v372
    %v374 = vpop.f32.mrf.mxu0
    %v375 = vadd.f32 0.0, %v374
    %376 = vmatmul.bf16.gmra.mxu0 %v216
    %v377 = vpop.f32.mrf.mxu0
    %v378 = vadd.f32 0.0, %v377
    %v379 = vpop.f32.mrf.mxu0
    %v380 = vadd.f32 0.0, %v379
    %381 = vmatmul.bf16.gmra.mxu0 %v219
    %v382 = vpop.f32.mrf.mxu0
    %v383 = vadd.f32 0.0, %v382
    %v384 = vpop.f32.mrf.mxu0
    %v385 = vadd.f32 0.0, %v384
    %386 = vmatmul.bf16.gmra.mxu0 %v222
    %v387 = vpop.f32.mrf.mxu0
    %v388 = vadd.f32 0.0, %v387
    %v389 = vpop.f32.mrf.mxu0
    %v390 = vadd.f32 0.0, %v389
    %391 = vmatmul.bf16.gmra.mxu0 %v225
    %v392 = vpop.f32.mrf.mxu0
    %v393 = vadd.f32 0.0, %v392
    %v394 = vpop.f32.mrf.mxu0
    %v395 = vadd.f32 0.0, %v394
    %396 = vmatmul.bf16.gmra.mxu0 %v228
    %v397 = vpop.f32.mrf.mxu0
    %v398 = vadd.f32 0.0, %v397
    %v399 = vpop.f32.mrf.mxu0
    %v400 = vadd.f32 0.0, %v399
    %401 = vmatmul.bf16.gmra.mxu0 %v231
    %v402 = vpop.f32.mrf.mxu0
    %v403 = vadd.f32 0.0, %v402
    %v404 = vpop.f32.mrf.mxu0
    %v405 = vadd.f32 0.0, %v404
    %406 = vmatmul.bf16.gmra.mxu0 %v234
    %v407 = vpop.f32.mrf.mxu0
    %v408 = vadd.f32 0.0, %v407
    %v409 = vpop.f32.mrf.mxu0
    %v410 = vadd.f32 0.0, %v409
    %411 = vmatmul.bf16.gmra.mxu0 %v237
    %v412 = vpop.f32.mrf.mxu0
    %v413 = vadd.f32 0.0, %v412
    %v414 = vpop.f32.mrf.mxu0
    %v415 = vadd.f32 0.0, %v414
    %416 = vdwg.mxu0
    %417 = vmatpush.bf16.msra.mxu0 0
    %418 = vmatpush.bf16.msra.mxu0 0
    %419 = vmatpush.bf16.msra.mxu0 0
    %420 = vmatpush.bf16.msra.mxu0 0
    %421 = vmatpush.bf16.msra.mxu0 %v172
    %422 = vmatpush.bf16.msra.mxu0 %v168
    %423 = vmatpush.bf16.msra.mxu0 %v164
    %424 = vmatpush.bf16.msra.mxu0 %v160
    %425 = vmatmul.bf16.gmra.mxu0 %v192
    %v426 = vpop.f32.mrf.mxu0
    %v427 = vadd.f32 0.0, %v426
    %v428 = vpop.f32.mrf.mxu0
    %v429 = vadd.f32 0.0, %v428
    %430 = vmatmul.bf16.gmra.mxu0 %v195
    %v431 = vpop.f32.mrf.mxu0
    %v432 = vadd.f32 0.0, %v431
    %v433 = vpop.f32.mrf.mxu0
    %v434 = vadd.f32 0.0, %v433
    %435 = vmatmul.bf16.gmra.mxu0 %v198
    %v436 = vpop.f32.mrf.mxu0
    %v437 = vadd.f32 0.0, %v436
    %v438 = vpop.f32.mrf.mxu0
    %v439 = vadd.f32 0.0, %v438
    %440 = vmatmul.bf16.gmra.mxu0 %v201
    %v441 = vpop.f32.mrf.mxu0
    %v442 = vadd.f32 0.0, %v441
    %v443 = vpop.f32.mrf.mxu0
    %v444 = vadd.f32 0.0, %v443
    %445 = vmatmul.bf16.gmra.mxu0 %v204
    %v446 = vpop.f32.mrf.mxu0
    %v447 = vadd.f32 0.0, %v446
    %v448 = vpop.f32.mrf.mxu0
    %v449 = vadd.f32 0.0, %v448
    %450 = vmatmul.bf16.gmra.mxu0 %v207
    %v451 = vpop.f32.mrf.mxu0
    %v452 = vadd.f32 0.0, %v451
    %v453 = vpop.f32.mrf.mxu0
    %v454 = vadd.f32 0.0, %v453
    %455 = vmatmul.bf16.gmra.mxu0 %v210
    %v456 = vpop.f32.mrf.mxu0
    %v457 = vadd.f32 0.0, %v456
    %v458 = vpop.f32.mrf.mxu0
    %v459 = vadd.f32 0.0, %v458
    %460 = vmatmul.bf16.gmra.mxu0 %v213
    %v461 = vpop.f32.mrf.mxu0
    %v462 = vadd.f32 0.0, %v461
    %v463 = vpop.f32.mrf.mxu0
    %v464 = vadd.f32 0.0, %v463
    %465 = vmatmul.bf16.gmra.mxu0 %v216
    %v466 = vpop.f32.mrf.mxu0
    %v467 = vadd.f32 0.0, %v466
    %v468 = vpop.f32.mrf.mxu0
    %v469 = vadd.f32 0.0, %v468
    %470 = vmatmul.bf16.gmra.mxu0 %v219
    %v471 = vpop.f32.mrf.mxu0
    %v472 = vadd.f32 0.0, %v471
    %v473 = vpop.f32.mrf.mxu0
    %v474 = vadd.f32 0.0, %v473
    %475 = vmatmul.bf16.gmra.mxu0 %v222
    %v476 = vpop.f32.mrf.mxu0
    %v477 = vadd.f32 0.0, %v476
    %v478 = vpop.f32.mrf.mxu0
    %v479 = vadd.f32 0.0, %v478
    %480 = vmatmul.bf16.gmra.mxu0 %v225
    %v481 = vpop.f32.mrf.mxu0
    %v482 = vadd.f32 0.0, %v481
    %v483 = vpop.f32.mrf.mxu0
    %v484 = vadd.f32 0.0, %v483
    %485 = vmatmul.bf16.gmra.mxu0 %v228
    %v486 = vpop.f32.mrf.mxu0
    %v487 = vadd.f32 0.0, %v486
    %v488 = vpop.f32.mrf.mxu0
    %v489 = vadd.f32 0.0, %v488
    %490 = vmatmul.bf16.gmra.mxu0 %v231
    %v491 = vpop.f32.mrf.mxu0
    %v492 = vadd.f32 0.0, %v491
    %v493 = vpop.f32.mrf.mxu0
    %v494 = vadd.f32 0.0, %v493
    %495 = vmatmul.bf16.gmra.mxu0 %v234
    %v496 = vpop.f32.mrf.mxu0
    %v497 = vadd.f32 0.0, %v496
    %v498 = vpop.f32.mrf.mxu0
    %v499 = vadd.f32 0.0, %v498
    %500 = vmatmul.bf16.gmra.mxu0 %v237
    %v501 = vpop.f32.mrf.mxu0
    %v502 = vadd.f32 0.0, %v501
    %v503 = vpop.f32.mrf.mxu0
    %v504 = vadd.f32 0.0, %v503
    %505 = vdwg.mxu0
    %506 = vmatpush.bf16.msra.mxu0 0
    %507 = vmatpush.bf16.msra.mxu0 0
    %508 = vmatpush.bf16.msra.mxu0 0
    %509 = vmatpush.bf16.msra.mxu0 0
    %510 = vmatpush.bf16.msra.mxu0 %v173
    %511 = vmatpush.bf16.msra.mxu0 %v169
    %512 = vmatpush.bf16.msra.mxu0 %v165
    %513 = vmatpush.bf16.msra.mxu0 %v161
    %514 = vmatmul.bf16.gmra.mxu0 %v192
    %v515 = vpop.f32.mrf.mxu0
    %v516 = vadd.f32 0.0, %v515
    %v517 = vpop.f32.mrf.mxu0
    %v518 = vadd.f32 0.0, %v517
    %519 = vmatmul.bf16.gmra.mxu0 %v195
    %v520 = vpop.f32.mrf.mxu0
    %v521 = vadd.f32 0.0, %v520
    %v522 = vpop.f32.mrf.mxu0
    %v523 = vadd.f32 0.0, %v522
    %524 = vmatmul.bf16.gmra.mxu0 %v198
    %v525 = vpop.f32.mrf.mxu0
    %v526 = vadd.f32 0.0, %v525
    %v527 = vpop.f32.mrf.mxu0
    %v528 = vadd.f32 0.0, %v527
    %529 = vmatmul.bf16.gmra.mxu0 %v201
    %v530 = vpop.f32.mrf.mxu0
    %v531 = vadd.f32 0.0, %v530
    %v532 = vpop.f32.mrf.mxu0
    %v533 = vadd.f32 0.0, %v532
    %534 = vmatmul.bf16.gmra.mxu0 %v204
    %v535 = vpop.f32.mrf.mxu0
    %v536 = vadd.f32 0.0, %v535
    %v537 = vpop.f32.mrf.mxu0
    %v538 = vadd.f32 0.0, %v537
    %539 = vmatmul.bf16.gmra.mxu0 %v207
    %v540 = vpop.f32.mrf.mxu0
    %v541 = vadd.f32 0.0, %v540
    %v542 = vpop.f32.mrf.mxu0
    %v543 = vadd.f32 0.0, %v542
    %544 = vmatmul.bf16.gmra.mxu0 %v210
    %v545 = vpop.f32.mrf.mxu0
    %v546 = vadd.f32 0.0, %v545
    %v547 = vpop.f32.mrf.mxu0
    %v548 = vadd.f32 0.0, %v547
    %549 = vmatmul.bf16.gmra.mxu0 %v213
    %v550 = vpop.f32.mrf.mxu0
    %v551 = vadd.f32 0.0, %v550
    %v552 = vpop.f32.mrf.mxu0
    %v553 = vadd.f32 0.0, %v552
    %554 = vmatmul.bf16.gmra.mxu0 %v216
    %v555 = vpop.f32.mrf.mxu0
    %v556 = vadd.f32 0.0, %v555
    %v557 = vpop.f32.mrf.mxu0
    %v558 = vadd.f32 0.0, %v557
    %559 = vmatmul.bf16.gmra.mxu0 %v219
    %v560 = vpop.f32.mrf.mxu0
    %v561 = vadd.f32 0.0, %v560
    %v562 = vpop.f32.mrf.mxu0
    %v563 = vadd.f32 0.0, %v562
    %564 = vmatmul.bf16.gmra.mxu0 %v222
    %v565 = vpop.f32.mrf.mxu0
    %v566 = vadd.f32 0.0, %v565
    %v567 = vpop.f32.mrf.mxu0
    %v568 = vadd.f32 0.0, %v567
    %569 = vmatmul.bf16.gmra.mxu0 %v225
    %v570 = vpop.f32.mrf.mxu0
    %v571 = vadd.f32 0.0, %v570
    %v572 = vpop.f32.mrf.mxu0
    %v573 = vadd.f32 0.0, %v572
    %574 = vmatmul.bf16.gmra.mxu0 %v228
    %v575 = vpop.f32.mrf.mxu0
    %v576 = vadd.f32 0.0, %v575
    %v577 = vpop.f32.mrf.mxu0
    %v578 = vadd.f32 0.0, %v577
    %579 = vmatmul.bf16.gmra.mxu0 %v231
    %v580 = vpop.f32.mrf.mxu0
    %v581 = vadd.f32 0.0, %v580
    %v582 = vpop.f32.mrf.mxu0
    %v583 = vadd.f32 0.0, %v582
    %584 = vmatmul.bf16.gmra.mxu0 %v234
    %v585 = vpop.f32.mrf.mxu0
    %v586 = vadd.f32 0.0, %v585
    %v587 = vpop.f32.mrf.mxu0
    %v588 = vadd.f32 0.0, %v587
    %589 = vmatmul.bf16.gmra.mxu0 %v237
    %v590 = vpop.f32.mrf.mxu0
    %v591 = vadd.f32 0.0, %v590
    %v592 = vpop.f32.mrf.mxu0
    %v593 = vadd.f32 0.0, %v592
    %594 = vdwg.mxu0
    %v595 = vpack.c.bf16 %v338, %v249
    %v596 = vpack.c.bf16 %v516, %v427
    %v597 = vpack.c.bf16 %v340, %v251
    %v598 = vpack.c.bf16 %v518, %v429
    %v599 = vpack.c.bf16 %v343, %v254
    %v600 = vpack.c.bf16 %v521, %v432
    %v601 = vpack.c.bf16 %v345, %v256
    %v602 = vpack.c.bf16 %v523, %v434
    %v603 = vpack.c.bf16 %v348, %v259
    %v604 = vpack.c.bf16 %v526, %v437
    %v605 = vpack.c.bf16 %v350, %v261
    %v606 = vpack.c.bf16 %v528, %v439
    %v607 = vpack.c.bf16 %v353, %v264
    %v608 = vpack.c.bf16 %v531, %v442
    %v609 = vpack.c.bf16 %v355, %v266
    %v610 = vpack.c.bf16 %v533, %v444
    %v611 = vpack.c.bf16 %v358, %v269
    %v612 = vpack.c.bf16 %v536, %v447
    %v613 = vpack.c.bf16 %v360, %v271
    %v614 = vpack.c.bf16 %v538, %v449
    %v615 = vpack.c.bf16 %v363, %v274
    %v616 = vpack.c.bf16 %v541, %v452
    %v617 = vpack.c.bf16 %v365, %v276
    %v618 = vpack.c.bf16 %v543, %v454
    %v619 = vpack.c.bf16 %v368, %v279
    %v620 = vpack.c.bf16 %v546, %v457
    %v621 = vpack.c.bf16 %v370, %v281
    %v622 = vpack.c.bf16 %v548, %v459
    %v623 = vpack.c.bf16 %v373, %v284
    %v624 = vpack.c.bf16 %v551, %v462
    %v625 = vpack.c.bf16 %v375, %v286
    %v626 = vpack.c.bf16 %v553, %v464
    %v627 = vpack.c.bf16 %v378, %v289
    %v628 = vpack.c.bf16 %v556, %v467
    %v629 = vpack.c.bf16 %v380, %v291
    %v630 = vpack.c.bf16 %v558, %v469
    %v631 = vpack.c.bf16 %v383, %v294
    %v632 = vpack.c.bf16 %v561, %v472
    %v633 = vpack.c.bf16 %v385, %v296
    %v634 = vpack.c.bf16 %v563, %v474
    %v635 = vpack.c.bf16 %v388, %v299
    %v636 = vpack.c.bf16 %v566, %v477
    %v637 = vpack.c.bf16 %v390, %v301
    %v638 = vpack.c.bf16 %v568, %v479
    %v639 = vpack.c.bf16 %v393, %v304
    %v640 = vpack.c.bf16 %v571, %v482
    %v641 = vpack.c.bf16 %v395, %v306
    %v642 = vpack.c.bf16 %v573, %v484
    %v643 = vpack.c.bf16 %v398, %v309
    %v644 = vpack.c.bf16 %v576, %v487
    %v645 = vpack.c.bf16 %v400, %v311
    %v646 = vpack.c.bf16 %v578, %v489
    %v647 = vpack.c.bf16 %v403, %v314
    %v648 = vpack.c.bf16 %v581, %v492
    %v649 = vpack.c.bf16 %v405, %v316
    %v650 = vpack.c.bf16 %v583, %v494
    %v651 = vpack.c.bf16 %v408, %v319
    %v652 = vpack.c.bf16 %v586, %v497
    %v653 = vpack.c.bf16 %v410, %v321
    %v654 = vpack.c.bf16 %v588, %v499
    %v655 = vpack.c.bf16 %v413, %v324
    %v656 = vpack.c.bf16 %v591, %v502
    %v657 = vpack.c.bf16 %v415, %v326
    %v658 = vpack.c.bf16 %v593, %v504
    %v659 = vld [vmem:[%s2] sm:$0xf]
    %661 = vst [vmem:[#allocation1] ss:$9 sm:$0xff] %v659
    %v662 = vld [vmem:[#allocation1] sm:$0xff]
    %v663 = vld [vmem:[#allocation1 + $0x9] sm:$0xff]
    %v664 = vld [vmem:[#allocation1 + $0x12] sm:$0xff]
    %v665 = vld [vmem:[#allocation1 + $0x1b] sm:$0xff]
    %v666 = vpack.i.b16 %v662, %v662
    %v668 = vperm.slane %v666, 0
    %v669 = vpack.i.b16 %v663, %v663
    %v671 = vperm.slane %v669, 0
    %v672 = vpack.i.b16 %v664, %v664
    %v674 = vperm.slane %v672, 0
    %v675 = vpack.i.b16 %v665, %v665
    %v677 = vperm.slane %v675, 0
    %v678 = vunpack.c.l.bf16 %v595
    %v679 = vunpack.c.h.bf16 %v595
    %v680 = vunpack.c.l.bf16 %v596
    %v681 = vunpack.c.h.bf16 %v596
    %v682 = vunpack.c.l.bf16 %v597
    %v683 = vunpack.c.h.bf16 %v597
    %v684 = vunpack.c.l.bf16 %v598
    %v685 = vunpack.c.h.bf16 %v598
    %v686 = vunpack.c.l.bf16 %v599
    %v687 = vunpack.c.h.bf16 %v599
    %v688 = vunpack.c.l.bf16 %v600
    %v689 = vunpack.c.h.bf16 %v600
    %v690 = vunpack.c.l.bf16 %v601
    %v691 = vunpack.c.h.bf16 %v601
    %v692 = vunpack.c.l.bf16 %v602
    %v693 = vunpack.c.h.bf16 %v602
    %v694 = vunpack.c.l.bf16 %v603
    %v695 = vunpack.c.h.bf16 %v603
    %v696 = vunpack.c.l.bf16 %v604
    %v697 = vunpack.c.h.bf16 %v604
    %v698 = vunpack.c.l.bf16 %v605
    %v699 = vunpack.c.h.bf16 %v605
    %v700 = vunpack.c.l.bf16 %v606
    %v701 = vunpack.c.h.bf16 %v606
    %v702 = vunpack.c.l.bf16 %v607
    %v703 = vunpack.c.h.bf16 %v607
    %v704 = vunpack.c.l.bf16 %v608
    %v705 = vunpack.c.h.bf16 %v608
    %v706 = vunpack.c.l.bf16 %v609
    %v707 = vunpack.c.h.bf16 %v609
    %v708 = vunpack.c.l.bf16 %v610
    %v709 = vunpack.c.h.bf16 %v610
    %v710 = vunpack.c.l.bf16 %v611
    %v711 = vunpack.c.h.bf16 %v611
    %v712 = vunpack.c.l.bf16 %v612
    %v713 = vunpack.c.h.bf16 %v612
    %v714 = vunpack.c.l.bf16 %v613
    %v715 = vunpack.c.h.bf16 %v613
    %v716 = vunpack.c.l.bf16 %v614
    %v717 = vunpack.c.h.bf16 %v614
    %v718 = vunpack.c.l.bf16 %v615
    %v719 = vunpack.c.h.bf16 %v615
    %v720 = vunpack.c.l.bf16 %v616
    %v721 = vunpack.c.h.bf16 %v616
    %v722 = vunpack.c.l.bf16 %v617
    %v723 = vunpack.c.h.bf16 %v617
    %v724 = vunpack.c.l.bf16 %v618
    %v725 = vunpack.c.h.bf16 %v618
    %v726 = vunpack.c.l.bf16 %v619
    %v727 = vunpack.c.h.bf16 %v619
    %v728 = vunpack.c.l.bf16 %v620
    %v729 = vunpack.c.h.bf16 %v620
    %v730 = vunpack.c.l.bf16 %v621
    %v731 = vunpack.c.h.bf16 %v621
    %v732 = vunpack.c.l.bf16 %v622
    %v733 = vunpack.c.h.bf16 %v622
    %v734 = vunpack.c.l.bf16 %v623
    %v735 = vunpack.c.h.bf16 %v623
    %v736 = vunpack.c.l.bf16 %v624
    %v737 = vunpack.c.h.bf16 %v624
    %v738 = vunpack.c.l.bf16 %v625
    %v739 = vunpack.c.h.bf16 %v625
    %v740 = vunpack.c.l.bf16 %v626
    %v741 = vunpack.c.h.bf16 %v626
    %v742 = vunpack.c.l.bf16 %v627
    %v743 = vunpack.c.h.bf16 %v627
    %v744 = vunpack.c.l.bf16 %v628
    %v745 = vunpack.c.h.bf16 %v628
    %v746 = vunpack.c.l.bf16 %v629
    %v747 = vunpack.c.h.bf16 %v629
    %v748 = vunpack.c.l.bf16 %v630
    %v749 = vunpack.c.h.bf16 %v630
    %v750 = vunpack.c.l.bf16 %v631
    %v751 = vunpack.c.h.bf16 %v631
    %v752 = vunpack.c.l.bf16 %v632
    %v753 = vunpack.c.h.bf16 %v632
    %v754 = vunpack.c.l.bf16 %v633
    %v755 = vunpack.c.h.bf16 %v633
    %v756 = vunpack.c.l.bf16 %v634
    %v757 = vunpack.c.h.bf16 %v634
    %v758 = vunpack.c.l.bf16 %v635
    %v759 = vunpack.c.h.bf16 %v635
    %v760 = vunpack.c.l.bf16 %v636
    %v761 = vunpack.c.h.bf16 %v636
    %v762 = vunpack.c.l.bf16 %v637
    %v763 = vunpack.c.h.bf16 %v637
    %v764 = vunpack.c.l.bf16 %v638
    %v765 = vunpack.c.h.bf16 %v638
    %v766 = vunpack.c.l.bf16 %v639
    %v767 = vunpack.c.h.bf16 %v639
    %v768 = vunpack.c.l.bf16 %v640
    %v769 = vunpack.c.h.bf16 %v640
    %v770 = vunpack.c.l.bf16 %v641
    %v771 = vunpack.c.h.bf16 %v641
    %v772 = vunpack.c.l.bf16 %v642
    %v773 = vunpack.c.h.bf16 %v642
    %v774 = vunpack.c.l.bf16 %v643
    %v775 = vunpack.c.h.bf16 %v643
    %v776 = vunpack.c.l.bf16 %v644
    %v777 = vunpack.c.h.bf16 %v644
    %v778 = vunpack.c.l.bf16 %v645
    %v779 = vunpack.c.h.bf16 %v645
    %v780 = vunpack.c.l.bf16 %v646
    %v781 = vunpack.c.h.bf16 %v646
    %v782 = vunpack.c.l.bf16 %v647
    %v783 = vunpack.c.h.bf16 %v647
    %v784 = vunpack.c.l.bf16 %v648
    %v785 = vunpack.c.h.bf16 %v648
    %v786 = vunpack.c.l.bf16 %v649
    %v787 = vunpack.c.h.bf16 %v649
    %v788 = vunpack.c.l.bf16 %v650
    %v789 = vunpack.c.h.bf16 %v650
    %v790 = vunpack.c.l.bf16 %v651
    %v791 = vunpack.c.h.bf16 %v651
    %v792 = vunpack.c.l.bf16 %v652
    %v793 = vunpack.c.h.bf16 %v652
    %v794 = vunpack.c.l.bf16 %v653
    %v795 = vunpack.c.h.bf16 %v653
    %v796 = vunpack.c.l.bf16 %v654
    %v797 = vunpack.c.h.bf16 %v654
    %v798 = vunpack.c.l.bf16 %v655
    %v799 = vunpack.c.h.bf16 %v655
    %v800 = vunpack.c.l.bf16 %v656
    %v801 = vunpack.c.h.bf16 %v656
    %v802 = vunpack.c.l.bf16 %v657
    %v803 = vunpack.c.h.bf16 %v657
    %v804 = vunpack.c.l.bf16 %v658
    %v805 = vunpack.c.h.bf16 %v658
    %v806 = vunpack.c.l.bf16 %v668
    %v807 = vunpack.c.l.bf16 %v671
    %v808 = vunpack.c.l.bf16 %v674
    %v809 = vunpack.c.l.bf16 %v677
    %v810 = vadd.f32 %v678, %v806
    %v811 = vadd.f32 %v679, %v807
    %v812 = vadd.f32 %v680, %v808
    %v813 = vadd.f32 %v681, %v809
    %v814 = vadd.f32 %v682, %v806
    %v815 = vadd.f32 %v683, %v807
    %v816 = vadd.f32 %v684, %v808
    %v817 = vadd.f32 %v685, %v809
    %v818 = vadd.f32 %v686, %v806
    %v819 = vadd.f32 %v687, %v807
    %v820 = vadd.f32 %v688, %v808
    %v821 = vadd.f32 %v689, %v809
    %v822 = vadd.f32 %v690, %v806
    %v823 = vadd.f32 %v691, %v807
    %v824 = vadd.f32 %v692, %v808
    %v825 = vadd.f32 %v693, %v809
    %v826 = vadd.f32 %v694, %v806
    %v827 = vadd.f32 %v695, %v807
    %v828 = vadd.f32 %v696, %v808
    %v829 = vadd.f32 %v697, %v809
    %v830 = vadd.f32 %v698, %v806
    %v831 = vadd.f32 %v699, %v807
    %v832 = vadd.f32 %v700, %v808
    %v833 = vadd.f32 %v701, %v809
    %v834 = vadd.f32 %v702, %v806
    %v835 = vadd.f32 %v703, %v807
    %v836 = vadd.f32 %v704, %v808
    %v837 = vadd.f32 %v705, %v809
    %v838 = vadd.f32 %v706, %v806
    %v839 = vadd.f32 %v707, %v807
    %v840 = vadd.f32 %v708, %v808
    %v841 = vadd.f32 %v709, %v809
    %v842 = vadd.f32 %v710, %v806
    %v843 = vadd.f32 %v711, %v807
    %v844 = vadd.f32 %v712, %v808
    %v845 = vadd.f32 %v713, %v809
    %v846 = vadd.f32 %v714, %v806
    %v847 = vadd.f32 %v715, %v807
    %v848 = vadd.f32 %v716, %v808
    %v849 = vadd.f32 %v717, %v809
    %v850 = vadd.f32 %v718, %v806
    %v851 = vadd.f32 %v719, %v807
    %v852 = vadd.f32 %v720, %v808
    %v853 = vadd.f32 %v721, %v809
    %v854 = vadd.f32 %v722, %v806
    %v855 = vadd.f32 %v723, %v807
    %v856 = vadd.f32 %v724, %v808
    %v857 = vadd.f32 %v725, %v809
    %v858 = vadd.f32 %v726, %v806
    %v859 = vadd.f32 %v727, %v807
    %v860 = vadd.f32 %v728, %v808
    %v861 = vadd.f32 %v729, %v809
    %v862 = vadd.f32 %v730, %v806
    %v863 = vadd.f32 %v731, %v807
    %v864 = vadd.f32 %v732, %v808
    %v865 = vadd.f32 %v733, %v809
    %v866 = vadd.f32 %v734, %v806
    %v867 = vadd.f32 %v735, %v807
    %v868 = vadd.f32 %v736, %v808
    %v869 = vadd.f32 %v737, %v809
    %v870 = vadd.f32 %v738, %v806
    %v871 = vadd.f32 %v739, %v807
    %v872 = vadd.f32 %v740, %v808
    %v873 = vadd.f32 %v741, %v809
    %v874 = vadd.f32 %v742, %v806
    %v875 = vadd.f32 %v743, %v807
    %v876 = vadd.f32 %v744, %v808
    %v877 = vadd.f32 %v745, %v809
    %v878 = vadd.f32 %v746, %v806
    %v879 = vadd.f32 %v747, %v807
    %v880 = vadd.f32 %v748, %v808
    %v881 = vadd.f32 %v749, %v809
    %v882 = vadd.f32 %v750, %v806
    %v883 = vadd.f32 %v751, %v807
    %v884 = vadd.f32 %v752, %v808
    %v885 = vadd.f32 %v753, %v809
    %v886 = vadd.f32 %v754, %v806
    %v887 = vadd.f32 %v755, %v807
    %v888 = vadd.f32 %v756, %v808
    %v889 = vadd.f32 %v757, %v809
    %v890 = vadd.f32 %v758, %v806
    %v891 = vadd.f32 %v759, %v807
    %v892 = vadd.f32 %v760, %v808
    %v893 = vadd.f32 %v761, %v809
    %v894 = vadd.f32 %v762, %v806
    %v895 = vadd.f32 %v763, %v807
    %v896 = vadd.f32 %v764, %v808
    %v897 = vadd.f32 %v765, %v809
    %v898 = vadd.f32 %v766, %v806
    %v899 = vadd.f32 %v767, %v807
    %v900 = vadd.f32 %v768, %v808
    %v901 = vadd.f32 %v769, %v809
    %v902 = vadd.f32 %v770, %v806
    %v903 = vadd.f32 %v771, %v807
    %v904 = vadd.f32 %v772, %v808
    %v905 = vadd.f32 %v773, %v809
    %v906 = vadd.f32 %v774, %v806
    %v907 = vadd.f32 %v775, %v807
    %v908 = vadd.f32 %v776, %v808
    %v909 = vadd.f32 %v777, %v809
    %v910 = vadd.f32 %v778, %v806
    %v911 = vadd.f32 %v779, %v807
    %v912 = vadd.f32 %v780, %v808
    %v913 = vadd.f32 %v781, %v809
    %v914 = vadd.f32 %v782, %v806
    %v915 = vadd.f32 %v783, %v807
    %v916 = vadd.f32 %v784, %v808
    %v917 = vadd.f32 %v785, %v809
    %v918 = vadd.f32 %v786, %v806
    %v919 = vadd.f32 %v787, %v807
    %v920 = vadd.f32 %v788, %v808
    %v921 = vadd.f32 %v789, %v809
    %v922 = vadd.f32 %v790, %v806
    %v923 = vadd.f32 %v791, %v807
    %v924 = vadd.f32 %v792, %v808
    %v925 = vadd.f32 %v793, %v809
    %v926 = vadd.f32 %v794, %v806
    %v927 = vadd.f32 %v795, %v807
    %v928 = vadd.f32 %v796, %v808
    %v929 = vadd.f32 %v797, %v809
    %v930 = vadd.f32 %v798, %v806
    %v931 = vadd.f32 %v799, %v807
    %v932 = vadd.f32 %v800, %v808
    %v933 = vadd.f32 %v801, %v809
    %v934 = vadd.f32 %v802, %v806
    %v935 = vadd.f32 %v803, %v807
    %v936 = vadd.f32 %v804, %v808
    %v937 = vadd.f32 %v805, %v809
    %v938 = vpack.c.bf16 %v811, %v810
    %v939 = vpack.c.bf16 %v813, %v812
    %v940 = vpack.c.bf16 %v815, %v814
    %v941 = vpack.c.bf16 %v817, %v816
    %v942 = vpack.c.bf16 %v819, %v818
    %v943 = vpack.c.bf16 %v821, %v820
    %v944 = vpack.c.bf16 %v823, %v822
    %v945 = vpack.c.bf16 %v825, %v824
    %v946 = vpack.c.bf16 %v827, %v826
    %v947 = vpack.c.bf16 %v829, %v828
    %v948 = vpack.c.bf16 %v831, %v830
    %v949 = vpack.c.bf16 %v833, %v832
    %v950 = vpack.c.bf16 %v835, %v834
    %v951 = vpack.c.bf16 %v837, %v836
    %v952 = vpack.c.bf16 %v839, %v838
    %v953 = vpack.c.bf16 %v841, %v840
    %v954 = vpack.c.bf16 %v843, %v842
    %v955 = vpack.c.bf16 %v845, %v844
    %v956 = vpack.c.bf16 %v847, %v846
    %v957 = vpack.c.bf16 %v849, %v848
    %v958 = vpack.c.bf16 %v851, %v850
    %v959 = vpack.c.bf16 %v853, %v852
    %v960 = vpack.c.bf16 %v855, %v854
    %v961 = vpack.c.bf16 %v857, %v856
    %v962 = vpack.c.bf16 %v859, %v858
    %v963 = vpack.c.bf16 %v861, %v860
    %v964 = vpack.c.bf16 %v863, %v862
    %v965 = vpack.c.bf16 %v865, %v864
    %v966 = vpack.c.bf16 %v867, %v866
    %v967 = vpack.c.bf16 %v869, %v868
    %v968 = vpack.c.bf16 %v871, %v870
    %v969 = vpack.c.bf16 %v873, %v872
    %v970 = vpack.c.bf16 %v875, %v874
    %v971 = vpack.c.bf16 %v877, %v876
    %v972 = vpack.c.bf16 %v879, %v878
    %v973 = vpack.c.bf16 %v881, %v880
    %v974 = vpack.c.bf16 %v883, %v882
    %v975 = vpack.c.bf16 %v885, %v884
    %v976 = vpack.c.bf16 %v887, %v886
    %v977 = vpack.c.bf16 %v889, %v888
    %v978 = vpack.c.bf16 %v891, %v890
    %v979 = vpack.c.bf16 %v893, %v892
    %v980 = vpack.c.bf16 %v895, %v894
    %v981 = vpack.c.bf16 %v897, %v896
    %v982 = vpack.c.bf16 %v899, %v898
    %v983 = vpack.c.bf16 %v901, %v900
    %v984 = vpack.c.bf16 %v903, %v902
    %v985 = vpack.c.bf16 %v905, %v904
    %v986 = vpack.c.bf16 %v907, %v906
    %v987 = vpack.c.bf16 %v909, %v908
    %v988 = vpack.c.bf16 %v911, %v910
    %v989 = vpack.c.bf16 %v913, %v912
    %v990 = vpack.c.bf16 %v915, %v914
    %v991 = vpack.c.bf16 %v917, %v916
    %v992 = vpack.c.bf16 %v919, %v918
    %v993 = vpack.c.bf16 %v921, %v920
    %v994 = vpack.c.bf16 %v923, %v922
    %v995 = vpack.c.bf16 %v925, %v924
    %v996 = vpack.c.bf16 %v927, %v926
    %v997 = vpack.c.bf16 %v929, %v928
    %v998 = vpack.c.bf16 %v931, %v930
    %v999 = vpack.c.bf16 %v933, %v932
    %v1000 = vpack.c.bf16 %v935, %v934
    %v1001 = vpack.c.bf16 %v937, %v936
    %v1002 = vunpack.c.l.bf16 %v938
    %v1003 = vunpack.c.h.bf16 %v938
    %v1004 = vunpack.c.l.bf16 %v939
    %v1005 = vunpack.c.h.bf16 %v939
    %v1006 = vunpack.c.l.bf16 %v940
    %v1007 = vunpack.c.h.bf16 %v940
    %v1008 = vunpack.c.l.bf16 %v941
    %v1009 = vunpack.c.h.bf16 %v941
    %v1010 = vunpack.c.l.bf16 %v942
    %v1011 = vunpack.c.h.bf16 %v942
    %v1012 = vunpack.c.l.bf16 %v943
    %v1013 = vunpack.c.h.bf16 %v943
    %v1014 = vunpack.c.l.bf16 %v944
    %v1015 = vunpack.c.h.bf16 %v944
    %v1016 = vunpack.c.l.bf16 %v945
    %v1017 = vunpack.c.h.bf16 %v945
    %v1018 = vunpack.c.l.bf16 %v946
    %v1019 = vunpack.c.h.bf16 %v946
    %v1020 = vunpack.c.l.bf16 %v947
    %v1021 = vunpack.c.h.bf16 %v947
    %v1022 = vunpack.c.l.bf16 %v948
    %v1023 = vunpack.c.h.bf16 %v948
    %v1024 = vunpack.c.l.bf16 %v949
    %v1025 = vunpack.c.h.bf16 %v949
    %v1026 = vunpack.c.l.bf16 %v950
    %v1027 = vunpack.c.h.bf16 %v950
    %v1028 = vunpack.c.l.bf16 %v951
    %v1029 = vunpack.c.h.bf16 %v951
    %v1030 = vunpack.c.l.bf16 %v952
    %v1031 = vunpack.c.h.bf16 %v952
    %v1032 = vunpack.c.l.bf16 %v953
    %v1033 = vunpack.c.h.bf16 %v953
    %v1034 = vunpack.c.l.bf16 %v954
    %v1035 = vunpack.c.h.bf16 %v954
    %v1036 = vunpack.c.l.bf16 %v955
    %v1037 = vunpack.c.h.bf16 %v955
    %v1038 = vunpack.c.l.bf16 %v956
    %v1039 = vunpack.c.h.bf16 %v956
    %v1040 = vunpack.c.l.bf16 %v957
    %v1041 = vunpack.c.h.bf16 %v957
    %v1042 = vunpack.c.l.bf16 %v958
    %v1043 = vunpack.c.h.bf16 %v958
    %v1044 = vunpack.c.l.bf16 %v959
    %v1045 = vunpack.c.h.bf16 %v959
    %v1046 = vunpack.c.l.bf16 %v960
    %v1047 = vunpack.c.h.bf16 %v960
    %v1048 = vunpack.c.l.bf16 %v961
    %v1049 = vunpack.c.h.bf16 %v961
    %v1050 = vunpack.c.l.bf16 %v962
    %v1051 = vunpack.c.h.bf16 %v962
    %v1052 = vunpack.c.l.bf16 %v963
    %v1053 = vunpack.c.h.bf16 %v963
    %v1054 = vunpack.c.l.bf16 %v964
    %v1055 = vunpack.c.h.bf16 %v964
    %v1056 = vunpack.c.l.bf16 %v965
    %v1057 = vunpack.c.h.bf16 %v965
    %v1058 = vunpack.c.l.bf16 %v966
    %v1059 = vunpack.c.h.bf16 %v966
    %v1060 = vunpack.c.l.bf16 %v967
    %v1061 = vunpack.c.h.bf16 %v967
    %v1062 = vunpack.c.l.bf16 %v968
    %v1063 = vunpack.c.h.bf16 %v968
    %v1064 = vunpack.c.l.bf16 %v969
    %v1065 = vunpack.c.h.bf16 %v969
    %v1066 = vunpack.c.l.bf16 %v970
    %v1067 = vunpack.c.h.bf16 %v970
    %v1068 = vunpack.c.l.bf16 %v971
    %v1069 = vunpack.c.h.bf16 %v971
    %v1070 = vunpack.c.l.bf16 %v972
    %v1071 = vunpack.c.h.bf16 %v972
    %v1072 = vunpack.c.l.bf16 %v973
    %v1073 = vunpack.c.h.bf16 %v973
    %v1074 = vunpack.c.l.bf16 %v974
    %v1075 = vunpack.c.h.bf16 %v974
    %v1076 = vunpack.c.l.bf16 %v975
    %v1077 = vunpack.c.h.bf16 %v975
    %v1078 = vunpack.c.l.bf16 %v976
    %v1079 = vunpack.c.h.bf16 %v976
    %v1080 = vunpack.c.l.bf16 %v977
    %v1081 = vunpack.c.h.bf16 %v977
    %v1082 = vunpack.c.l.bf16 %v978
    %v1083 = vunpack.c.h.bf16 %v978
    %v1084 = vunpack.c.l.bf16 %v979
    %v1085 = vunpack.c.h.bf16 %v979
    %v1086 = vunpack.c.l.bf16 %v980
    %v1087 = vunpack.c.h.bf16 %v980
    %v1088 = vunpack.c.l.bf16 %v981
    %v1089 = vunpack.c.h.bf16 %v981
    %v1090 = vunpack.c.l.bf16 %v982
    %v1091 = vunpack.c.h.bf16 %v982
    %v1092 = vunpack.c.l.bf16 %v983
    %v1093 = vunpack.c.h.bf16 %v983
    %v1094 = vunpack.c.l.bf16 %v984
    %v1095 = vunpack.c.h.bf16 %v984
    %v1096 = vunpack.c.l.bf16 %v985
    %v1097 = vunpack.c.h.bf16 %v985
    %v1098 = vunpack.c.l.bf16 %v986
    %v1099 = vunpack.c.h.bf16 %v986
    %v1100 = vunpack.c.l.bf16 %v987
    %v1101 = vunpack.c.h.bf16 %v987
    %v1102 = vunpack.c.l.bf16 %v988
    %v1103 = vunpack.c.h.bf16 %v988
    %v1104 = vunpack.c.l.bf16 %v989
    %v1105 = vunpack.c.h.bf16 %v989
    %v1106 = vunpack.c.l.bf16 %v990
    %v1107 = vunpack.c.h.bf16 %v990
    %v1108 = vunpack.c.l.bf16 %v991
    %v1109 = vunpack.c.h.bf16 %v991
    %v1110 = vunpack.c.l.bf16 %v992
    %v1111 = vunpack.c.h.bf16 %v992
    %v1112 = vunpack.c.l.bf16 %v993
    %v1113 = vunpack.c.h.bf16 %v993
    %v1114 = vunpack.c.l.bf16 %v994
    %v1115 = vunpack.c.h.bf16 %v994
    %v1116 = vunpack.c.l.bf16 %v995
    %v1117 = vunpack.c.h.bf16 %v995
    %v1118 = vunpack.c.l.bf16 %v996
    %v1119 = vunpack.c.h.bf16 %v996
    %v1120 = vunpack.c.l.bf16 %v997
    %v1121 = vunpack.c.h.bf16 %v997
    %v1122 = vunpack.c.l.bf16 %v998
    %v1123 = vunpack.c.h.bf16 %v998
    %v1124 = vunpack.c.l.bf16 %v999
    %v1125 = vunpack.c.h.bf16 %v999
    %v1126 = vunpack.c.l.bf16 %v1000
    %v1127 = vunpack.c.h.bf16 %v1000
    %v1128 = vunpack.c.l.bf16 %v1001
    %v1129 = vunpack.c.h.bf16 %v1001
    %v1130 = vmax.f32 %v1002, 0.0
    %v1131 = vmax.f32 %v1003, 0.0
    %v1132 = vmax.f32 %v1004, 0.0
    %v1133 = vmax.f32 %v1005, 0.0
    %v1134 = vmax.f32 %v1006, 0.0
    %v1135 = vmax.f32 %v1007, 0.0
    %v1136 = vmax.f32 %v1008, 0.0
    %v1137 = vmax.f32 %v1009, 0.0
    %v1138 = vmax.f32 %v1010, 0.0
    %v1139 = vmax.f32 %v1011, 0.0
    %v1140 = vmax.f32 %v1012, 0.0
    %v1141 = vmax.f32 %v1013, 0.0
    %v1142 = vmax.f32 %v1014, 0.0
    %v1143 = vmax.f32 %v1015, 0.0
    %v1144 = vmax.f32 %v1016, 0.0
    %v1145 = vmax.f32 %v1017, 0.0
    %v1146 = vmax.f32 %v1018, 0.0
    %v1147 = vmax.f32 %v1019, 0.0
    %v1148 = vmax.f32 %v1020, 0.0
    %v1149 = vmax.f32 %v1021, 0.0
    %v1150 = vmax.f32 %v1022, 0.0
    %v1151 = vmax.f32 %v1023, 0.0
    %v1152 = vmax.f32 %v1024, 0.0
    %v1153 = vmax.f32 %v1025, 0.0
    %v1154 = vmax.f32 %v1026, 0.0
    %v1155 = vmax.f32 %v1027, 0.0
    %v1156 = vmax.f32 %v1028, 0.0
    %v1157 = vmax.f32 %v1029, 0.0
    %v1158 = vmax.f32 %v1030, 0.0
    %v1159 = vmax.f32 %v1031, 0.0
    %v1160 = vmax.f32 %v1032, 0.0
    %v1161 = vmax.f32 %v1033, 0.0
    %v1162 = vmax.f32 %v1034, 0.0
    %v1163 = vmax.f32 %v1035, 0.0
    %v1164 = vmax.f32 %v1036, 0.0
    %v1165 = vmax.f32 %v1037, 0.0
    %v1166 = vmax.f32 %v1038, 0.0
    %v1167 = vmax.f32 %v1039, 0.0
    %v1168 = vmax.f32 %v1040, 0.0
    %v1169 = vmax.f32 %v1041, 0.0
    %v1170 = vmax.f32 %v1042, 0.0
    %v1171 = vmax.f32 %v1043, 0.0
    %v1172 = vmax.f32 %v1044, 0.0
    %v1173 = vmax.f32 %v1045, 0.0
    %v1174 = vmax.f32 %v1046, 0.0
    %v1175 = vmax.f32 %v1047, 0.0
    %v1176 = vmax.f32 %v1048, 0.0
    %v1177 = vmax.f32 %v1049, 0.0
    %v1178 = vmax.f32 %v1050, 0.0
    %v1179 = vmax.f32 %v1051, 0.0
    %v1180 = vmax.f32 %v1052, 0.0
    %v1181 = vmax.f32 %v1053, 0.0
    %v1182 = vmax.f32 %v1054, 0.0
    %v1183 = vmax.f32 %v1055, 0.0
    %v1184 = vmax.f32 %v1056, 0.0
    %v1185 = vmax.f32 %v1057, 0.0
    %v1186 = vmax.f32 %v1058, 0.0
    %v1187 = vmax.f32 %v1059, 0.0
    %v1188 = vmax.f32 %v1060, 0.0
    %v1189 = vmax.f32 %v1061, 0.0
    %v1190 = vmax.f32 %v1062, 0.0
    %v1191 = vmax.f32 %v1063, 0.0
    %v1192 = vmax.f32 %v1064, 0.0
    %v1193 = vmax.f32 %v1065, 0.0
    %v1194 = vmax.f32 %v1066, 0.0
    %v1195 = vmax.f32 %v1067, 0.0
    %v1196 = vmax.f32 %v1068, 0.0
    %v1197 = vmax.f32 %v1069, 0.0
    %v1198 = vmax.f32 %v1070, 0.0
    %v1199 = vmax.f32 %v1071, 0.0
    %v1200 = vmax.f32 %v1072, 0.0
    %v1201 = vmax.f32 %v1073, 0.0
    %v1202 = vmax.f32 %v1074, 0.0
    %v1203 = vmax.f32 %v1075, 0.0
    %v1204 = vmax.f32 %v1076, 0.0
    %v1205 = vmax.f32 %v1077, 0.0
    %v1206 = vmax.f32 %v1078, 0.0
    %v1207 = vmax.f32 %v1079, 0.0
    %v1208 = vmax.f32 %v1080, 0.0
    %v1209 = vmax.f32 %v1081, 0.0
    %v1210 = vmax.f32 %v1082, 0.0
    %v1211 = vmax.f32 %v1083, 0.0
    %v1212 = vmax.f32 %v1084, 0.0
    %v1213 = vmax.f32 %v1085, 0.0
    %v1214 = vmax.f32 %v1086, 0.0
    %v1215 = vmax.f32 %v1087, 0.0
    %v1216 = vmax.f32 %v1088, 0.0
    %v1217 = vmax.f32 %v1089, 0.0
    %v1218 = vmax.f32 %v1090, 0.0
    %v1219 = vmax.f32 %v1091, 0.0
    %v1220 = vmax.f32 %v1092, 0.0
    %v1221 = vmax.f32 %v1093, 0.0
    %v1222 = vmax.f32 %v1094, 0.0
    %v1223 = vmax.f32 %v1095, 0.0
    %v1224 = vmax.f32 %v1096, 0.0
    %v1225 = vmax.f32 %v1097, 0.0
    %v1226 = vmax.f32 %v1098, 0.0
    %v1227 = vmax.f32 %v1099, 0.0
    %v1228 = vmax.f32 %v1100, 0.0
    %v1229 = vmax.f32 %v1101, 0.0
    %v1230 = vmax.f32 %v1102, 0.0
    %v1231 = vmax.f32 %v1103, 0.0
    %v1232 = vmax.f32 %v1104, 0.0
    %v1233 = vmax.f32 %v1105, 0.0
    %v1234 = vmax.f32 %v1106, 0.0
    %v1235 = vmax.f32 %v1107, 0.0
    %v1236 = vmax.f32 %v1108, 0.0
    %v1237 = vmax.f32 %v1109, 0.0
    %v1238 = vmax.f32 %v1110, 0.0
    %v1239 = vmax.f32 %v1111, 0.0
    %v1240 = vmax.f32 %v1112, 0.0
    %v1241 = vmax.f32 %v1113, 0.0
    %v1242 = vmax.f32 %v1114, 0.0
    %v1243 = vmax.f32 %v1115, 0.0
    %v1244 = vmax.f32 %v1116, 0.0
    %v1245 = vmax.f32 %v1117, 0.0
    %v1246 = vmax.f32 %v1118, 0.0
    %v1247 = vmax.f32 %v1119, 0.0
    %v1248 = vmax.f32 %v1120, 0.0
    %v1249 = vmax.f32 %v1121, 0.0
    %v1250 = vmax.f32 %v1122, 0.0
    %v1251 = vmax.f32 %v1123, 0.0
    %v1252 = vmax.f32 %v1124, 0.0
    %v1253 = vmax.f32 %v1125, 0.0
    %v1254 = vmax.f32 %v1126, 0.0
    %v1255 = vmax.f32 %v1127, 0.0
    %v1256 = vmax.f32 %v1128, 0.0
    %v1257 = vmax.f32 %v1129, 0.0
    %v1258 = vpack.c.bf16 %v1134, %v1130
    %v1259 = vpack.c.bf16 %v1135, %v1131
    %v1260 = vpack.c.bf16 %v1136, %v1132
    %v1261 = vpack.c.bf16 %v1137, %v1133
    %v1262 = vpack.c.bf16 %v1142, %v1138
    %v1263 = vpack.c.bf16 %v1143, %v1139
    %v1264 = vpack.c.bf16 %v1144, %v1140
    %v1265 = vpack.c.bf16 %v1145, %v1141
    %v1266 = vpack.c.bf16 %v1150, %v1146
    %v1267 = vpack.c.bf16 %v1151, %v1147
    %v1268 = vpack.c.bf16 %v1152, %v1148
    %v1269 = vpack.c.bf16 %v1153, %v1149
    %v1270 = vpack.c.bf16 %v1158, %v1154
    %v1271 = vpack.c.bf16 %v1159, %v1155
    %v1272 = vpack.c.bf16 %v1160, %v1156
    %v1273 = vpack.c.bf16 %v1161, %v1157
    %v1274 = vpack.c.bf16 %v1166, %v1162
    %v1275 = vpack.c.bf16 %v1167, %v1163
    %v1276 = vpack.c.bf16 %v1168, %v1164
    %v1277 = vpack.c.bf16 %v1169, %v1165
    %v1278 = vpack.c.bf16 %v1174, %v1170
    %v1279 = vpack.c.bf16 %v1175, %v1171
    %v1280 = vpack.c.bf16 %v1176, %v1172
    %v1281 = vpack.c.bf16 %v1177, %v1173
    %v1282 = vpack.c.bf16 %v1182, %v1178
    %v1283 = vpack.c.bf16 %v1183, %v1179
    %v1284 = vpack.c.bf16 %v1184, %v1180
    %v1285 = vpack.c.bf16 %v1185, %v1181
    %v1286 = vpack.c.bf16 %v1190, %v1186
    %v1287 = vpack.c.bf16 %v1191, %v1187
    %v1288 = vpack.c.bf16 %v1192, %v1188
    %v1289 = vpack.c.bf16 %v1193, %v1189
    %v1290 = vpack.c.bf16 %v1198, %v1194
    %v1291 = vpack.c.bf16 %v1199, %v1195
    %v1292 = vpack.c.bf16 %v1200, %v1196
    %v1293 = vpack.c.bf16 %v1201, %v1197
    %v1294 = vpack.c.bf16 %v1206, %v1202
    %v1295 = vpack.c.bf16 %v1207, %v1203
    %v1296 = vpack.c.bf16 %v1208, %v1204
    %v1297 = vpack.c.bf16 %v1209, %v1205
    %v1298 = vpack.c.bf16 %v1214, %v1210
    %v1299 = vpack.c.bf16 %v1215, %v1211
    %v1300 = vpack.c.bf16 %v1216, %v1212
    %v1301 = vpack.c.bf16 %v1217, %v1213
    %v1302 = vpack.c.bf16 %v1222, %v1218
    %v1303 = vpack.c.bf16 %v1223, %v1219
    %v1304 = vpack.c.bf16 %v1224, %v1220
    %v1305 = vpack.c.bf16 %v1225, %v1221
    %v1306 = vpack.c.bf16 %v1230, %v1226
    %v1307 = vpack.c.bf16 %v1231, %v1227
    %v1308 = vpack.c.bf16 %v1232, %v1228
    %v1309 = vpack.c.bf16 %v1233, %v1229
    %v1310 = vpack.c.bf16 %v1238, %v1234
    %v1311 = vpack.c.bf16 %v1239, %v1235
    %v1312 = vpack.c.bf16 %v1240, %v1236
    %v1313 = vpack.c.bf16 %v1241, %v1237
    %v1314 = vpack.c.bf16 %v1246, %v1242
    %v1315 = vpack.c.bf16 %v1247, %v1243
    %v1316 = vpack.c.bf16 %v1248, %v1244
    %v1317 = vpack.c.bf16 %v1249, %v1245
    %v1318 = vpack.c.bf16 %v1254, %v1250
    %v1319 = vpack.c.bf16 %v1255, %v1251
    %v1320 = vpack.c.bf16 %v1256, %v1252
    %v1321 = vpack.c.bf16 %v1257, %v1253
    %v1322 = vld [vmem:[%s3] sm:$0xf]
    %v1323 = vld [vmem:[%s3 + $0x4] sm:$0xf]
    %v1324 = vld [vmem:[%s3 + $0x8] sm:$0xf]
    %v1325 = vld [vmem:[%s3 + $0xc] sm:$0xf]
    %v1326 = vld [vmem:[%s3 + $0x10] sm:$0xf]
    %v1327 = vld [vmem:[%s3 + $0x14] sm:$0xf]
    %v1328 = vld [vmem:[%s3 + $0x18] sm:$0xf]
    %v1329 = vld [vmem:[%s3 + $0x1c] sm:$0xf]
    %v1330 = vld [vmem:[%s3 + $0x20] sm:$0xf]
    %v1331 = vld [vmem:[%s3 + $0x24] sm:$0xf]
    %v1332 = vld [vmem:[%s3 + $0x28] sm:$0xf]
    %v1333 = vld [vmem:[%s3 + $0x2c] sm:$0xf]
    %v1334 = vld [vmem:[%s3 + $0x30] sm:$0xf]
    %v1335 = vld [vmem:[%s3 + $0x34] sm:$0xf]
    %v1336 = vld [vmem:[%s3 + $0x38] sm:$0xf]
    %v1337 = vld [vmem:[%s3 + $0x3c] sm:$0xf]
    %v1338 = vld [vmem:[%s3 + $0x40] sm:$0xf]
    %v1339 = vld [vmem:[%s3 + $0x44] sm:$0xf]
    %v1340 = vld [vmem:[%s3 + $0x48] sm:$0xf]
    %v1341 = vld [vmem:[%s3 + $0x4c] sm:$0xf]
    %v1342 = vld [vmem:[%s3 + $0x50] sm:$0xf]
    %v1343 = vld [vmem:[%s3 + $0x54] sm:$0xf]
    %v1344 = vld [vmem:[%s3 + $0x58] sm:$0xf]
    %v1345 = vld [vmem:[%s3 + $0x5c] sm:$0xf]
    %v1346 = vld [vmem:[%s3 + $0x60] sm:$0xf]
    %v1347 = vld [vmem:[%s3 + $0x64] sm:$0xf]
    %v1348 = vld [vmem:[%s3 + $0x68] sm:$0xf]
    %v1349 = vld [vmem:[%s3 + $0x6c] sm:$0xf]
    %v1350 = vld [vmem:[%s3 + $0x70] sm:$0xf]
    %v1351 = vld [vmem:[%s3 + $0x74] sm:$0xf]
    %v1352 = vld [vmem:[%s3 + $0x78] sm:$0xf]
    %v1353 = vld [vmem:[%s3 + $0x7c] sm:$0xf]
    %v1354 = vld [vmem:[%s3 + $0x80] sm:$0xf]
    %v1355 = vld [vmem:[%s3 + $0x84] sm:$0xf]
    %v1356 = vld [vmem:[%s3 + $0x88] sm:$0xf]
    %v1357 = vld [vmem:[%s3 + $0x8c] sm:$0xf]
    %v1358 = vld [vmem:[%s3 + $0x90] sm:$0xf]
    %v1359 = vld [vmem:[%s3 + $0x94] sm:$0xf]
    %v1360 = vld [vmem:[%s3 + $0x98] sm:$0xf]
    %v1361 = vld [vmem:[%s3 + $0x9c] sm:$0xf]
    %v1362 = vld [vmem:[%s3 + $0xa0] sm:$0xf]
    %v1363 = vld [vmem:[%s3 + $0xa4] sm:$0xf]
    %v1364 = vld [vmem:[%s3 + $0xa8] sm:$0xf]
    %v1365 = vld [vmem:[%s3 + $0xac] sm:$0xf]
    %v1366 = vld [vmem:[%s3 + $0xb0] sm:$0xf]
    %v1367 = vld [vmem:[%s3 + $0xb4] sm:$0xf]
    %v1368 = vld [vmem:[%s3 + $0xb8] sm:$0xf]
    %v1369 = vld [vmem:[%s3 + $0xbc] sm:$0xf]
    %v1370 = vld [vmem:[%s3 + $0xc0] sm:$0xf]
    %v1371 = vld [vmem:[%s3 + $0xc4] sm:$0xf]
    %v1372 = vld [vmem:[%s3 + $0xc8] sm:$0xf]
    %v1373 = vld [vmem:[%s3 + $0xcc] sm:$0xf]
    %v1374 = vld [vmem:[%s3 + $0xd0] sm:$0xf]
    %v1375 = vld [vmem:[%s3 + $0xd4] sm:$0xf]
    %v1376 = vld [vmem:[%s3 + $0xd8] sm:$0xf]
    %v1377 = vld [vmem:[%s3 + $0xdc] sm:$0xf]
    %v1378 = vld [vmem:[%s3 + $0xe0] sm:$0xf]
    %v1379 = vld [vmem:[%s3 + $0xe4] sm:$0xf]
    %v1380 = vld [vmem:[%s3 + $0xe8] sm:$0xf]
    %v1381 = vld [vmem:[%s3 + $0xec] sm:$0xf]
    %v1382 = vld [vmem:[%s3 + $0xf0] sm:$0xf]
    %v1383 = vld [vmem:[%s3 + $0xf4] sm:$0xf]
    %v1384 = vld [vmem:[%s3 + $0xf8] sm:$0xf]
    %v1385 = vld [vmem:[%s3 + $0xfc] sm:$0xf]
    %v1386 = vld [vmem:[%s4] sm:$0x1]
    %v1388 = vperm.slane %v1386, 0
    %v1454 = vunpack.c.l.b16 %v1322
    %v1455 = vunpack.c.l.b16 %v1323
    %v1456 = vunpack.c.l.b16 %v1324
    %v1457 = vunpack.c.l.b16 %v1325
    %v1458 = vunpack.c.l.b16 %v1326
    %v1459 = vunpack.c.l.b16 %v1327
    %v1460 = vunpack.c.l.b16 %v1328
    %v1461 = vunpack.c.l.b16 %v1329
    %v1462 = vunpack.c.l.b16 %v1330
    %v1463 = vunpack.c.l.b16 %v1331
    %v1464 = vunpack.c.l.b16 %v1332
    %v1465 = vunpack.c.l.b16 %v1333
    %v1466 = vunpack.c.l.b16 %v1334
    %v1467 = vunpack.c.l.b16 %v1335
    %v1468 = vunpack.c.l.b16 %v1336
    %v1469 = vunpack.c.l.b16 %v1337
    %v1470 = vunpack.c.l.b16 %v1338
    %v1471 = vunpack.c.l.b16 %v1339
    %v1472 = vunpack.c.l.b16 %v1340
    %v1473 = vunpack.c.l.b16 %v1341
    %v1474 = vunpack.c.l.b16 %v1342
    %v1475 = vunpack.c.l.b16 %v1343
    %v1476 = vunpack.c.l.b16 %v1344
    %v1477 = vunpack.c.l.b16 %v1345
    %v1478 = vunpack.c.l.b16 %v1346
    %v1479 = vunpack.c.l.b16 %v1347
    %v1480 = vunpack.c.l.b16 %v1348
    %v1481 = vunpack.c.l.b16 %v1349
    %v1482 = vunpack.c.l.b16 %v1350
    %v1483 = vunpack.c.l.b16 %v1351
    %v1484 = vunpack.c.l.b16 %v1352
    %v1485 = vunpack.c.l.b16 %v1353
    %v1486 = vunpack.c.l.b16 %v1354
    %v1487 = vunpack.c.l.b16 %v1355
    %v1488 = vunpack.c.l.b16 %v1356
    %v1489 = vunpack.c.l.b16 %v1357
    %v1490 = vunpack.c.l.b16 %v1358
    %v1491 = vunpack.c.l.b16 %v1359
    %v1492 = vunpack.c.l.b16 %v1360
    %v1493 = vunpack.c.l.b16 %v1361
    %v1494 = vunpack.c.l.b16 %v1362
    %v1495 = vunpack.c.l.b16 %v1363
    %v1496 = vunpack.c.l.b16 %v1364
    %v1497 = vunpack.c.l.b16 %v1365
    %v1498 = vunpack.c.l.b16 %v1366
    %v1499 = vunpack.c.l.b16 %v1367
    %v1500 = vunpack.c.l.b16 %v1368
    %v1501 = vunpack.c.l.b16 %v1369
    %v1502 = vunpack.c.l.b16 %v1370
    %v1503 = vunpack.c.l.b16 %v1371
    %v1504 = vunpack.c.l.b16 %v1372
    %v1505 = vunpack.c.l.b16 %v1373
    %v1506 = vunpack.c.l.b16 %v1374
    %v1507 = vunpack.c.l.b16 %v1375
    %v1508 = vunpack.c.l.b16 %v1376
    %v1509 = vunpack.c.l.b16 %v1377
    %v1510 = vunpack.c.l.b16 %v1378
    %v1511 = vunpack.c.l.b16 %v1379
    %v1512 = vunpack.c.l.b16 %v1380
    %v1513 = vunpack.c.l.b16 %v1381
    %v1514 = vunpack.c.l.b16 %v1382
    %v1515 = vunpack.c.l.b16 %v1383
    %v1516 = vunpack.c.l.b16 %v1384
    %v1517 = vunpack.c.l.b16 %v1385
    %v1518 = vpack.c.b16 %v1455, %v1454
    %v1519 = vpack.c.b16 %v1457, %v1456
    %v1520 = vpack.c.b16 %v1459, %v1458
    %v1521 = vpack.c.b16 %v1461, %v1460
    %v1522 = vpack.c.b16 %v1463, %v1462
    %v1523 = vpack.c.b16 %v1465, %v1464
    %v1524 = vpack.c.b16 %v1467, %v1466
    %v1525 = vpack.c.b16 %v1469, %v1468
    %v1526 = vpack.c.b16 %v1471, %v1470
    %v1527 = vpack.c.b16 %v1473, %v1472
    %v1528 = vpack.c.b16 %v1475, %v1474
    %v1529 = vpack.c.b16 %v1477, %v1476
    %v1530 = vpack.c.b16 %v1479, %v1478
    %v1531 = vpack.c.b16 %v1481, %v1480
    %v1532 = vpack.c.b16 %v1483, %v1482
    %v1533 = vpack.c.b16 %v1485, %v1484
    %v1534 = vpack.c.b16 %v1487, %v1486
    %v1535 = vpack.c.b16 %v1489, %v1488
    %v1536 = vpack.c.b16 %v1491, %v1490
    %v1537 = vpack.c.b16 %v1493, %v1492
    %v1538 = vpack.c.b16 %v1495, %v1494
    %v1539 = vpack.c.b16 %v1497, %v1496
    %v1540 = vpack.c.b16 %v1499, %v1498
    %v1541 = vpack.c.b16 %v1501, %v1500
    %v1542 = vpack.c.b16 %v1503, %v1502
    %v1543 = vpack.c.b16 %v1505, %v1504
    %v1544 = vpack.c.b16 %v1507, %v1506
    %v1545 = vpack.c.b16 %v1509, %v1508
    %v1546 = vpack.c.b16 %v1511, %v1510
    %v1547 = vpack.c.b16 %v1513, %v1512
    %v1548 = vpack.c.b16 %v1515, %v1514
    %v1549 = vpack.c.b16 %v1517, %v1516
    %1582 = vmatpush.bf16.msra.mxu0 %v1525
    %1583 = vmatpush.bf16.msra.mxu0 %v1524
    %1584 = vmatpush.bf16.msra.mxu0 %v1523
    %1585 = vmatpush.bf16.msra.mxu0 %v1522
    %1586 = vmatpush.bf16.msra.mxu0 %v1521
    %1587 = vmatpush.bf16.msra.mxu0 %v1520
    %1588 = vmatpush.bf16.msra.mxu0 %v1519
    %1589 = vmatpush.bf16.msra.mxu0 %v1518
    %1590 = vmatmul.bf16.gmra.mxu0 %v1258
    %v1591 = vpop.f32.mrf.mxu0
    %v1592 = vadd.f32 %v1388, %v1591
    %v1593 = vpop.f32.mrf.mxu0
    %v1594 = vadd.f32 %v1388, %v1593
    %1595 = vmatmul.bf16.gmra.mxu0 %v1262
    %v1596 = vpop.f32.mrf.mxu0
    %v1597 = vadd.f32 %v1388, %v1596
    %v1598 = vpop.f32.mrf.mxu0
    %v1599 = vadd.f32 %v1388, %v1598
    %1600 = vmatmul.bf16.gmra.mxu0 %v1266
    %v1601 = vpop.f32.mrf.mxu0
    %v1602 = vadd.f32 %v1388, %v1601
    %v1603 = vpop.f32.mrf.mxu0
    %v1604 = vadd.f32 %v1388, %v1603
    %1605 = vmatmul.bf16.gmra.mxu0 %v1270
    %v1606 = vpop.f32.mrf.mxu0
    %v1607 = vadd.f32 %v1388, %v1606
    %v1608 = vpop.f32.mrf.mxu0
    %v1609 = vadd.f32 %v1388, %v1608
    %1610 = vmatmul.bf16.gmra.mxu0 %v1274
    %v1611 = vpop.f32.mrf.mxu0
    %v1612 = vadd.f32 %v1388, %v1611
    %v1613 = vpop.f32.mrf.mxu0
    %v1614 = vadd.f32 %v1388, %v1613
    %1615 = vmatmul.bf16.gmra.mxu0 %v1278
    %v1616 = vpop.f32.mrf.mxu0
    %v1617 = vadd.f32 %v1388, %v1616
    %v1618 = vpop.f32.mrf.mxu0
    %v1619 = vadd.f32 %v1388, %v1618
    %1620 = vmatmul.bf16.gmra.mxu0 %v1282
    %v1621 = vpop.f32.mrf.mxu0
    %v1622 = vadd.f32 %v1388, %v1621
    %v1623 = vpop.f32.mrf.mxu0
    %v1624 = vadd.f32 %v1388, %v1623
    %1625 = vmatmul.bf16.gmra.mxu0 %v1286
    %v1626 = vpop.f32.mrf.mxu0
    %v1627 = vadd.f32 %v1388, %v1626
    %v1628 = vpop.f32.mrf.mxu0
    %v1629 = vadd.f32 %v1388, %v1628
    %1630 = vmatmul.bf16.gmra.mxu0 %v1290
    %v1631 = vpop.f32.mrf.mxu0
    %v1632 = vadd.f32 %v1388, %v1631
    %v1633 = vpop.f32.mrf.mxu0
    %v1634 = vadd.f32 %v1388, %v1633
    %1635 = vmatmul.bf16.gmra.mxu0 %v1294
    %v1636 = vpop.f32.mrf.mxu0
    %v1637 = vadd.f32 %v1388, %v1636
    %v1638 = vpop.f32.mrf.mxu0
    %v1639 = vadd.f32 %v1388, %v1638
    %1640 = vmatmul.bf16.gmra.mxu0 %v1298
    %v1641 = vpop.f32.mrf.mxu0
    %v1642 = vadd.f32 %v1388, %v1641
    %v1643 = vpop.f32.mrf.mxu0
    %v1644 = vadd.f32 %v1388, %v1643
    %1645 = vmatmul.bf16.gmra.mxu0 %v1302
    %v1646 = vpop.f32.mrf.mxu0
    %v1647 = vadd.f32 %v1388, %v1646
    %v1648 = vpop.f32.mrf.mxu0
    %v1649 = vadd.f32 %v1388, %v1648
    %1650 = vmatmul.bf16.gmra.mxu0 %v1306
    %v1651 = vpop.f32.mrf.mxu0
    %v1652 = vadd.f32 %v1388, %v1651
    %v1653 = vpop.f32.mrf.mxu0
    %v1654 = vadd.f32 %v1388, %v1653
    %1655 = vmatmul.bf16.gmra.mxu0 %v1310
    %v1656 = vpop.f32.mrf.mxu0
    %v1657 = vadd.f32 %v1388, %v1656
    %v1658 = vpop.f32.mrf.mxu0
    %v1659 = vadd.f32 %v1388, %v1658
    %1660 = vmatmul.bf16.gmra.mxu0 %v1314
    %v1661 = vpop.f32.mrf.mxu0
    %v1662 = vadd.f32 %v1388, %v1661
    %v1663 = vpop.f32.mrf.mxu0
    %v1664 = vadd.f32 %v1388, %v1663
    %1665 = vmatmul.bf16.gmra.mxu0 %v1318
    %v1666 = vpop.f32.mrf.mxu0
    %v1667 = vadd.f32 %v1388, %v1666
    %v1668 = vpop.f32.mrf.mxu0
    %v1669 = vadd.f32 %v1388, %v1668
    %1670 = vdwg.mxu0
    %1671 = vmatpush.bf16.msra.mxu0 %v1533
    %1672 = vmatpush.bf16.msra.mxu0 %v1532
    %1673 = vmatpush.bf16.msra.mxu0 %v1531
    %1674 = vmatpush.bf16.msra.mxu0 %v1530
    %1675 = vmatpush.bf16.msra.mxu0 %v1529
    %1676 = vmatpush.bf16.msra.mxu0 %v1528
    %1677 = vmatpush.bf16.msra.mxu0 %v1527
    %1678 = vmatpush.bf16.msra.mxu0 %v1526
    %1679 = vmatmul.bf16.gmra.mxu0 %v1259
    %v1680 = vpop.f32.mrf.mxu0
    %v1681 = vadd.f32 %v1592, %v1680
    %v1682 = vpop.f32.mrf.mxu0
    %v1683 = vadd.f32 %v1594, %v1682
    %1684 = vmatmul.bf16.gmra.mxu0 %v1263
    %v1685 = vpop.f32.mrf.mxu0
    %v1686 = vadd.f32 %v1597, %v1685
    %v1687 = vpop.f32.mrf.mxu0
    %v1688 = vadd.f32 %v1599, %v1687
    %1689 = vmatmul.bf16.gmra.mxu0 %v1267
    %v1690 = vpop.f32.mrf.mxu0
    %v1691 = vadd.f32 %v1602, %v1690
    %v1692 = vpop.f32.mrf.mxu0
    %v1693 = vadd.f32 %v1604, %v1692
    %1694 = vmatmul.bf16.gmra.mxu0 %v1271
    %v1695 = vpop.f32.mrf.mxu0
    %v1696 = vadd.f32 %v1607, %v1695
    %v1697 = vpop.f32.mrf.mxu0
    %v1698 = vadd.f32 %v1609, %v1697
    %1699 = vmatmul.bf16.gmra.mxu0 %v1275
    %v1700 = vpop.f32.mrf.mxu0
    %v1701 = vadd.f32 %v1612, %v1700
    %v1702 = vpop.f32.mrf.mxu0
    %v1703 = vadd.f32 %v1614, %v1702
    %1704 = vmatmul.bf16.gmra.mxu0 %v1279
    %v1705 = vpop.f32.mrf.mxu0
    %v1706 = vadd.f32 %v1617, %v1705
    %v1707 = vpop.f32.mrf.mxu0
    %v1708 = vadd.f32 %v1619, %v1707
    %1709 = vmatmul.bf16.gmra.mxu0 %v1283
    %v1710 = vpop.f32.mrf.mxu0
    %v1711 = vadd.f32 %v1622, %v1710
    %v1712 = vpop.f32.mrf.mxu0
    %v1713 = vadd.f32 %v1624, %v1712
    %1714 = vmatmul.bf16.gmra.mxu0 %v1287
    %v1715 = vpop.f32.mrf.mxu0
    %v1716 = vadd.f32 %v1627, %v1715
    %v1717 = vpop.f32.mrf.mxu0
    %v1718 = vadd.f32 %v1629, %v1717
    %1719 = vmatmul.bf16.gmra.mxu0 %v1291
    %v1720 = vpop.f32.mrf.mxu0
    %v1721 = vadd.f32 %v1632, %v1720
    %v1722 = vpop.f32.mrf.mxu0
    %v1723 = vadd.f32 %v1634, %v1722
    %1724 = vmatmul.bf16.gmra.mxu0 %v1295
    %v1725 = vpop.f32.mrf.mxu0
    %v1726 = vadd.f32 %v1637, %v1725
    %v1727 = vpop.f32.mrf.mxu0
    %v1728 = vadd.f32 %v1639, %v1727
    %1729 = vmatmul.bf16.gmra.mxu0 %v1299
    %v1730 = vpop.f32.mrf.mxu0
    %v1731 = vadd.f32 %v1642, %v1730
    %v1732 = vpop.f32.mrf.mxu0
    %v1733 = vadd.f32 %v1644, %v1732
    %1734 = vmatmul.bf16.gmra.mxu0 %v1303
    %v1735 = vpop.f32.mrf.mxu0
    %v1736 = vadd.f32 %v1647, %v1735
    %v1737 = vpop.f32.mrf.mxu0
    %v1738 = vadd.f32 %v1649, %v1737
    %1739 = vmatmul.bf16.gmra.mxu0 %v1307
    %v1740 = vpop.f32.mrf.mxu0
    %v1741 = vadd.f32 %v1652, %v1740
    %v1742 = vpop.f32.mrf.mxu0
    %v1743 = vadd.f32 %v1654, %v1742
    %1744 = vmatmul.bf16.gmra.mxu0 %v1311
    %v1745 = vpop.f32.mrf.mxu0
    %v1746 = vadd.f32 %v1657, %v1745
    %v1747 = vpop.f32.mrf.mxu0
    %v1748 = vadd.f32 %v1659, %v1747
    %1749 = vmatmul.bf16.gmra.mxu0 %v1315
    %v1750 = vpop.f32.mrf.mxu0
    %v1751 = vadd.f32 %v1662, %v1750
    %v1752 = vpop.f32.mrf.mxu0
    %v1753 = vadd.f32 %v1664, %v1752
    %1754 = vmatmul.bf16.gmra.mxu0 %v1319
    %v1755 = vpop.f32.mrf.mxu0
    %v1756 = vadd.f32 %v1667, %v1755
    %v1757 = vpop.f32.mrf.mxu0
    %v1758 = vadd.f32 %v1669, %v1757
    %1759 = vdwg.mxu0
    %1760 = vmatpush.bf16.msra.mxu0 %v1541
    %1761 = vmatpush.bf16.msra.mxu0 %v1540
    %1762 = vmatpush.bf16.msra.mxu0 %v1539
    %1763 = vmatpush.bf16.msra.mxu0 %v1538
    %1764 = vmatpush.bf16.msra.mxu0 %v1537
    %1765 = vmatpush.bf16.msra.mxu0 %v1536
    %1766 = vmatpush.bf16.msra.mxu0 %v1535
    %1767 = vmatpush.bf16.msra.mxu0 %v1534
    %1768 = vmatmul.bf16.gmra.mxu0 %v1260
    %v1769 = vpop.f32.mrf.mxu0
    %v1770 = vadd.f32 %v1681, %v1769
    %v1771 = vpop.f32.mrf.mxu0
    %v1772 = vadd.f32 %v1683, %v1771
    %1773 = vmatmul.bf16.gmra.mxu0 %v1264
    %v1774 = vpop.f32.mrf.mxu0
    %v1775 = vadd.f32 %v1686, %v1774
    %v1776 = vpop.f32.mrf.mxu0
    %v1777 = vadd.f32 %v1688, %v1776
    %1778 = vmatmul.bf16.gmra.mxu0 %v1268
    %v1779 = vpop.f32.mrf.mxu0
    %v1780 = vadd.f32 %v1691, %v1779
    %v1781 = vpop.f32.mrf.mxu0
    %v1782 = vadd.f32 %v1693, %v1781
    %1783 = vmatmul.bf16.gmra.mxu0 %v1272
    %v1784 = vpop.f32.mrf.mxu0
    %v1785 = vadd.f32 %v1696, %v1784
    %v1786 = vpop.f32.mrf.mxu0
    %v1787 = vadd.f32 %v1698, %v1786
    %1788 = vmatmul.bf16.gmra.mxu0 %v1276
    %v1789 = vpop.f32.mrf.mxu0
    %v1790 = vadd.f32 %v1701, %v1789
    %v1791 = vpop.f32.mrf.mxu0
    %v1792 = vadd.f32 %v1703, %v1791
    %1793 = vmatmul.bf16.gmra.mxu0 %v1280
    %v1794 = vpop.f32.mrf.mxu0
    %v1795 = vadd.f32 %v1706, %v1794
    %v1796 = vpop.f32.mrf.mxu0
    %v1797 = vadd.f32 %v1708, %v1796
    %1798 = vmatmul.bf16.gmra.mxu0 %v1284
    %v1799 = vpop.f32.mrf.mxu0
    %v1800 = vadd.f32 %v1711, %v1799
    %v1801 = vpop.f32.mrf.mxu0
    %v1802 = vadd.f32 %v1713, %v1801
    %1803 = vmatmul.bf16.gmra.mxu0 %v1288
    %v1804 = vpop.f32.mrf.mxu0
    %v1805 = vadd.f32 %v1716, %v1804
    %v1806 = vpop.f32.mrf.mxu0
    %v1807 = vadd.f32 %v1718, %v1806
    %1808 = vmatmul.bf16.gmra.mxu0 %v1292
    %v1809 = vpop.f32.mrf.mxu0
    %v1810 = vadd.f32 %v1721, %v1809
    %v1811 = vpop.f32.mrf.mxu0
    %v1812 = vadd.f32 %v1723, %v1811
    %1813 = vmatmul.bf16.gmra.mxu0 %v1296
    %v1814 = vpop.f32.mrf.mxu0
    %v1815 = vadd.f32 %v1726, %v1814
    %v1816 = vpop.f32.mrf.mxu0
    %v1817 = vadd.f32 %v1728, %v1816
    %1818 = vmatmul.bf16.gmra.mxu0 %v1300
    %v1819 = vpop.f32.mrf.mxu0
    %v1820 = vadd.f32 %v1731, %v1819
    %v1821 = vpop.f32.mrf.mxu0
    %v1822 = vadd.f32 %v1733, %v1821
    %1823 = vmatmul.bf16.gmra.mxu0 %v1304
    %v1824 = vpop.f32.mrf.mxu0
    %v1825 = vadd.f32 %v1736, %v1824
    %v1826 = vpop.f32.mrf.mxu0
    %v1827 = vadd.f32 %v1738, %v1826
    %1828 = vmatmul.bf16.gmra.mxu0 %v1308
    %v1829 = vpop.f32.mrf.mxu0
    %v1830 = vadd.f32 %v1741, %v1829
    %v1831 = vpop.f32.mrf.mxu0
    %v1832 = vadd.f32 %v1743, %v1831
    %1833 = vmatmul.bf16.gmra.mxu0 %v1312
    %v1834 = vpop.f32.mrf.mxu0
    %v1835 = vadd.f32 %v1746, %v1834
    %v1836 = vpop.f32.mrf.mxu0
    %v1837 = vadd.f32 %v1748, %v1836
    %1838 = vmatmul.bf16.gmra.mxu0 %v1316
    %v1839 = vpop.f32.mrf.mxu0
    %v1840 = vadd.f32 %v1751, %v1839
    %v1841 = vpop.f32.mrf.mxu0
    %v1842 = vadd.f32 %v1753, %v1841
    %1843 = vmatmul.bf16.gmra.mxu0 %v1320
    %v1844 = vpop.f32.mrf.mxu0
    %v1845 = vadd.f32 %v1756, %v1844
    %v1846 = vpop.f32.mrf.mxu0
    %v1847 = vadd.f32 %v1758, %v1846
    %1848 = vdwg.mxu0
    %1849 = vmatpush.bf16.msra.mxu0 %v1549
    %1850 = vmatpush.bf16.msra.mxu0 %v1548
    %1851 = vmatpush.bf16.msra.mxu0 %v1547
    %1852 = vmatpush.bf16.msra.mxu0 %v1546
    %1853 = vmatpush.bf16.msra.mxu0 %v1545
    %1854 = vmatpush.bf16.msra.mxu0 %v1544
    %1855 = vmatpush.bf16.msra.mxu0 %v1543
    %1856 = vmatpush.bf16.msra.mxu0 %v1542
    %1857 = vmatmul.bf16.gmra.mxu0 %v1261
    %v1858 = vpop.f32.mrf.mxu0
    %v1859 = vadd.f32 %v1770, %v1858
    %v1860 = vpop.f32.mrf.mxu0
    %v1861 = vadd.f32 %v1772, %v1860
    %1862 = vmatmul.bf16.gmra.mxu0 %v1265
    %v1863 = vpop.f32.mrf.mxu0
    %v1864 = vadd.f32 %v1775, %v1863
    %v1865 = vpop.f32.mrf.mxu0
    %v1866 = vadd.f32 %v1777, %v1865
    %1867 = vmatmul.bf16.gmra.mxu0 %v1269
    %v1868 = vpop.f32.mrf.mxu0
    %v1869 = vadd.f32 %v1780, %v1868
    %v1870 = vpop.f32.mrf.mxu0
    %v1871 = vadd.f32 %v1782, %v1870
    %1872 = vmatmul.bf16.gmra.mxu0 %v1273
    %v1873 = vpop.f32.mrf.mxu0
    %v1874 = vadd.f32 %v1785, %v1873
    %v1875 = vpop.f32.mrf.mxu0
    %v1876 = vadd.f32 %v1787, %v1875
    %1877 = vmatmul.bf16.gmra.mxu0 %v1277
    %v1878 = vpop.f32.mrf.mxu0
    %v1879 = vadd.f32 %v1790, %v1878
    %v1880 = vpop.f32.mrf.mxu0
    %v1881 = vadd.f32 %v1792, %v1880
    %1882 = vmatmul.bf16.gmra.mxu0 %v1281
    %v1883 = vpop.f32.mrf.mxu0
    %v1884 = vadd.f32 %v1795, %v1883
    %v1885 = vpop.f32.mrf.mxu0
    %v1886 = vadd.f32 %v1797, %v1885
    %1887 = vmatmul.bf16.gmra.mxu0 %v1285
    %v1888 = vpop.f32.mrf.mxu0
    %v1889 = vadd.f32 %v1800, %v1888
    %v1890 = vpop.f32.mrf.mxu0
    %v1891 = vadd.f32 %v1802, %v1890
    %1892 = vmatmul.bf16.gmra.mxu0 %v1289
    %v1893 = vpop.f32.mrf.mxu0
    %v1894 = vadd.f32 %v1805, %v1893
    %v1895 = vpop.f32.mrf.mxu0
    %v1896 = vadd.f32 %v1807, %v1895
    %1897 = vmatmul.bf16.gmra.mxu0 %v1293
    %v1898 = vpop.f32.mrf.mxu0
    %v1899 = vadd.f32 %v1810, %v1898
    %v1900 = vpop.f32.mrf.mxu0
    %v1901 = vadd.f32 %v1812, %v1900
    %1902 = vmatmul.bf16.gmra.mxu0 %v1297
    %v1903 = vpop.f32.mrf.mxu0
    %v1904 = vadd.f32 %v1815, %v1903
    %v1905 = vpop.f32.mrf.mxu0
    %v1906 = vadd.f32 %v1817, %v1905
    %1907 = vmatmul.bf16.gmra.mxu0 %v1301
    %v1908 = vpop.f32.mrf.mxu0
    %v1909 = vadd.f32 %v1820, %v1908
    %v1910 = vpop.f32.mrf.mxu0
    %v1911 = vadd.f32 %v1822, %v1910
    %1912 = vmatmul.bf16.gmra.mxu0 %v1305
    %v1913 = vpop.f32.mrf.mxu0
    %v1914 = vadd.f32 %v1825, %v1913
    %v1915 = vpop.f32.mrf.mxu0
    %v1916 = vadd.f32 %v1827, %v1915
    %1917 = vmatmul.bf16.gmra.mxu0 %v1309
    %v1918 = vpop.f32.mrf.mxu0
    %v1919 = vadd.f32 %v1830, %v1918
    %v1920 = vpop.f32.mrf.mxu0
    %v1921 = vadd.f32 %v1832, %v1920
    %1922 = vmatmul.bf16.gmra.mxu0 %v1313
    %v1923 = vpop.f32.mrf.mxu0
    %v1924 = vadd.f32 %v1835, %v1923
    %v1925 = vpop.f32.mrf.mxu0
    %v1926 = vadd.f32 %v1837, %v1925
    %1927 = vmatmul.bf16.gmra.mxu0 %v1317
    %v1928 = vpop.f32.mrf.mxu0
    %v1929 = vadd.f32 %v1840, %v1928
    %v1930 = vpop.f32.mrf.mxu0
    %v1931 = vadd.f32 %v1842, %v1930
    %1932 = vmatmul.bf16.gmra.mxu0 %v1321
    %v1933 = vpop.f32.mrf.mxu0
    %v1934 = vadd.f32 %v1845, %v1933
    %v1935 = vpop.f32.mrf.mxu0
    %v1936 = vadd.f32 %v1847, %v1935
    %1937 = vdwg.mxu0
    %v1938 = vmul.f32 %v1859, 0.5
    %v1939 = vmul.f32 %v1861, 0.5
    %v1940 = vmul.f32 %v1864, 0.5
    %v1941 = vmul.f32 %v1866, 0.5
    %v1942 = vmul.f32 %v1869, 0.5
    %v1943 = vmul.f32 %v1871, 0.5
    %v1944 = vmul.f32 %v1874, 0.5
    %v1945 = vmul.f32 %v1876, 0.5
    %v1946 = vmul.f32 %v1879, 0.5
    %v1947 = vmul.f32 %v1881, 0.5
    %v1948 = vmul.f32 %v1884, 0.5
    %v1949 = vmul.f32 %v1886, 0.5
    %v1950 = vmul.f32 %v1889, 0.5
    %v1951 = vmul.f32 %v1891, 0.5
    %v1952 = vmul.f32 %v1894, 0.5
    %v1953 = vmul.f32 %v1896, 0.5
    %v1954 = vmul.f32 %v1899, 0.5
    %v1955 = vmul.f32 %v1901, 0.5
    %v1956 = vmul.f32 %v1904, 0.5
    %v1957 = vmul.f32 %v1906, 0.5
    %v1958 = vmul.f32 %v1909, 0.5
    %v1959 = vmul.f32 %v1911, 0.5
    %v1960 = vmul.f32 %v1914, 0.5
    %v1961 = vmul.f32 %v1916, 0.5
    %v1962 = vmul.f32 %v1919, 0.5
    %v1963 = vmul.f32 %v1921, 0.5
    %v1964 = vmul.f32 %v1924, 0.5
    %v1965 = vmul.f32 %v1926, 0.5
    %v1966 = vmul.f32 %v1929, 0.5
    %v1967 = vmul.f32 %v1931, 0.5
    %v1968 = vmul.f32 %v1934, 0.5
    %v1969 = vmul.f32 %v1936, 0.5
    %v1970 = vtanh.pop %v1938
    %v1971 = vtanh.pop %v1939
    %v1972 = vtanh.pop %v1940
    %v1973 = vtanh.pop %v1941
    %v1974 = vtanh.pop %v1942
    %v1975 = vtanh.pop %v1943
    %v1976 = vtanh.pop %v1944
    %v1977 = vtanh.pop %v1945
    %v1978 = vtanh.pop %v1946
    %v1979 = vtanh.pop %v1947
    %v1980 = vtanh.pop %v1948
    %v1981 = vtanh.pop %v1949
    %v1982 = vtanh.pop %v1950
    %v1983 = vtanh.pop %v1951
    %v1984 = vtanh.pop %v1952
    %v1985 = vtanh.pop %v1953
    %v1986 = vtanh.pop %v1954
    %v1987 = vtanh.pop %v1955
    %v1988 = vtanh.pop %v1956
    %v1989 = vtanh.pop %v1957
    %v1990 = vtanh.pop %v1958
    %v1991 = vtanh.pop %v1959
    %v1992 = vtanh.pop %v1960
    %v1993 = vtanh.pop %v1961
    %v1994 = vtanh.pop %v1962
    %v1995 = vtanh.pop %v1963
    %v1996 = vtanh.pop %v1964
    %v1997 = vtanh.pop %v1965
    %v1998 = vtanh.pop %v1966
    %v1999 = vtanh.pop %v1967
    %v2000 = vtanh.pop %v1968
    %v2001 = vtanh.pop %v1969
    %v2002 = vadd.f32 %v1970, 1.0
    %v2003 = vadd.f32 %v1971, 1.0
    %v2004 = vadd.f32 %v1972, 1.0
    %v2005 = vadd.f32 %v1973, 1.0
    %v2006 = vadd.f32 %v1974, 1.0
    %v2007 = vadd.f32 %v1975, 1.0
    %v2008 = vadd.f32 %v1976, 1.0
    %v2009 = vadd.f32 %v1977, 1.0
    %v2010 = vadd.f32 %v1978, 1.0
    %v2011 = vadd.f32 %v1979, 1.0
    %v2012 = vadd.f32 %v1980, 1.0
    %v2013 = vadd.f32 %v1981, 1.0
    %v2014 = vadd.f32 %v1982, 1.0
    %v2015 = vadd.f32 %v1983, 1.0
    %v2016 = vadd.f32 %v1984, 1.0
    %v2017 = vadd.f32 %v1985, 1.0
    %v2018 = vadd.f32 %v1986, 1.0
    %v2019 = vadd.f32 %v1987, 1.0
    %v2020 = vadd.f32 %v1988, 1.0
    %v2021 = vadd.f32 %v1989, 1.0
    %v2022 = vadd.f32 %v1990, 1.0
    %v2023 = vadd.f32 %v1991, 1.0
    %v2024 = vadd.f32 %v1992, 1.0
    %v2025 = vadd.f32 %v1993, 1.0
    %v2026 = vadd.f32 %v1994, 1.0
    %v2027 = vadd.f32 %v1995, 1.0
    %v2028 = vadd.f32 %v1996, 1.0
    %v2029 = vadd.f32 %v1997, 1.0
    %v2030 = vadd.f32 %v1998, 1.0
    %v2031 = vadd.f32 %v1999, 1.0
    %v2032 = vadd.f32 %v2000, 1.0
    %v2033 = vadd.f32 %v2001, 1.0
    %v2034 = vmul.f32 %v2002, 0.5
    %v2035 = vmul.f32 %v2003, 0.5
    %v2036 = vmul.f32 %v2004, 0.5
    %v2037 = vmul.f32 %v2005, 0.5
    %v2038 = vmul.f32 %v2006, 0.5
    %v2039 = vmul.f32 %v2007, 0.5
    %v2040 = vmul.f32 %v2008, 0.5
    %v2041 = vmul.f32 %v2009, 0.5
    %v2042 = vmul.f32 %v2010, 0.5
    %v2043 = vmul.f32 %v2011, 0.5
    %v2044 = vmul.f32 %v2012, 0.5
    %v2045 = vmul.f32 %v2013, 0.5
    %v2046 = vmul.f32 %v2014, 0.5
    %v2047 = vmul.f32 %v2015, 0.5
    %v2048 = vmul.f32 %v2016, 0.5
    %v2049 = vmul.f32 %v2017, 0.5
    %v2050 = vmul.f32 %v2018, 0.5
    %v2051 = vmul.f32 %v2019, 0.5
    %v2052 = vmul.f32 %v2020, 0.5
    %v2053 = vmul.f32 %v2021, 0.5
    %v2054 = vmul.f32 %v2022, 0.5
    %v2055 = vmul.f32 %v2023, 0.5
    %v2056 = vmul.f32 %v2024, 0.5
    %v2057 = vmul.f32 %v2025, 0.5
    %v2058 = vmul.f32 %v2026, 0.5
    %v2059 = vmul.f32 %v2027, 0.5
    %v2060 = vmul.f32 %v2028, 0.5
    %v2061 = vmul.f32 %v2029, 0.5
    %v2062 = vmul.f32 %v2030, 0.5
    %v2063 = vmul.f32 %v2031, 0.5
    %v2064 = vmul.f32 %v2032, 0.5
    %v2065 = vmul.f32 %v2033, 0.5
    %v2066 = vld [vmem:[%s5] sm:$0x1]
    %v2067 = vld [vmem:[#allocation2] sm:$0x1]
    %2069 = vset.pattern.permute.xlu0 0
    %2070 = vperm.xlu0 %2069, %v2067
    %v2071 = vpop.permute.xlu0 %2070
    %v2073 = vperm.slane %v2071, 0
    %2074 = vmatpush.xpose.msra.mxu0 %v2049
    %2075 = vmatpush.xpose.msra.mxu0 %v2048
    %2076 = vmatpush.xpose.msra.mxu0 %v2047
    %2077 = vmatpush.xpose.msra.mxu0 %v2046
    %2078 = vmatpush.xpose.msra.mxu0 %v2045
    %2079 = vmatpush.xpose.msra.mxu0 %v2044
    %2080 = vmatpush.xpose.msra.mxu0 %v2043
    %2081 = vmatpush.xpose.msra.mxu0 %v2042
    %2082 = vmatpush.xpose.msra.mxu0 %v2041
    %2083 = vmatpush.xpose.msra.mxu0 %v2040
    %2084 = vmatpush.xpose.msra.mxu0 %v2039
    %2085 = vmatpush.xpose.msra.mxu0 %v2038
    %2086 = vmatpush.xpose.msra.mxu0 %v2037
    %2087 = vmatpush.xpose.msra.mxu0 %v2036
    %2088 = vmatpush.xpose.msra.mxu0 %v2035
    %2089 = vmatpush.xpose.msra.mxu0 %v2034
    %2090 = vmatmul.f32.gmra.mxu0 %v2066
    %v2091 = vpop.f32.mrf.mxu0
    %v2092 = vadd.f32 %v2073, %v2091
    %2093 = vdwg.mxu0
    %2094 = vmatpush.xpose.msra.mxu0 %v2065
    %2095 = vmatpush.xpose.msra.mxu0 %v2064
    %2096 = vmatpush.xpose.msra.mxu0 %v2063
    %2097 = vmatpush.xpose.msra.mxu0 %v2062
    %2098 = vmatpush.xpose.msra.mxu0 %v2061
    %2099 = vmatpush.xpose.msra.mxu0 %v2060
    %2100 = vmatpush.xpose.msra.mxu0 %v2059
    %2101 = vmatpush.xpose.msra.mxu0 %v2058
    %2102 = vmatpush.xpose.msra.mxu0 %v2057
    %2103 = vmatpush.xpose.msra.mxu0 %v2056
    %2104 = vmatpush.xpose.msra.mxu0 %v2055
    %2105 = vmatpush.xpose.msra.mxu0 %v2054
    %2106 = vmatpush.xpose.msra.mxu0 %v2053
    %2107 = vmatpush.xpose.msra.mxu0 %v2052
    %2108 = vmatpush.xpose.msra.mxu0 %v2051
    %2109 = vmatpush.xpose.msra.mxu0 %v2050
    %2110 = vmatmul.f32.gmra.mxu0 %v2066
    %v2111 = vpop.f32.mrf.mxu0
    %v2112 = vadd.f32 %v2073, %v2111
    %2113 = vdwg.mxu0
    %v2116 = vrot.slane %v2112, 7
    %vm2117 = vcmask 1040384
    %v2118 = vsel %vm2117, %v2092, %v2116
    %v2120 = vlaneseq
    %vm2121 = vcmp.ge.s32.totalorder %v2120, 0
    %vm2122 = vcmp.lt.s32.totalorder %v2120, 256
    %vm2123 = vmand %vm2121, %vm2122
    %2124 = vst.msk [vmem:[#allocation6] sm:$0x3] %vm2123, %v2118
    // Predicated region
    $region34: #{tpu_custom_call.1} parent=1 // pred_check
      _
    $region35: #{tpu_custom_call.1} parent=1 // pred_check_branch
      %2126 = sbr.rel (0) target = $region37
    $region36: #{tpu_custom_call.1} parent=1 // pred_region
      %2128 = vsyncadd [#allocation5], 0
      %s2130 = sshll.u32 [#allocation6], 4
      %s2131 = int_to_ptr.vmem [resolvable:$true] %s2130
      %s2132 = sshll.u32 %s7, 4
      %s2133 = int_to_ptr.hbm [resolvable:$true] %s2132
      %2135 = dma.vmem_to_hbm [thread:$0]  %s2131, 32, %s2133, [#allocation5]
    $region37: #{tpu_custom_call.1} parent=1 // pred_fallthru
      _
    // Predicated region
    $region38: #{tpu_custom_call.1} parent=1 // pred_check
      _
    $region39: #{tpu_custom_call.1} parent=1 // pred_check_branch
      %2137 = sbr.rel (0) target = $region41
    $region40: #{tpu_custom_call.1} parent=1 // pred_region
      %2139 = dma.done [#allocation5], 32
    $region41: #{tpu_custom_call.1} parent=1 // pred_fallthru
      _
    %2140 = vsyncpa [#allocation4], 1
    %2141 = vsyncpa [#allocation5], 1

</llo_original>
